<compile_context>
chip_gen: v6e
topology: v6e:2x2x1
jax: 0.10.0
libtpu: 0.0.40
codegen_flags: <defaults>
</compile_context>

<pallas_src>
import functools

import jax
import jax.numpy as jnp
from jax.experimental import pallas as pl
from jax.experimental.pallas import tpu as pltpu


def _attn_block_kernel(x_hbm, sel_ref, gamma_ref, beta_ref,
                       wqkv_ref, bqkv_ref, wp_ref, bp_ref,
                       o_ref,
                       x_scr, qkv_s, av_s, x_sem,
                       *, num_heads, eps, q_tile, matmul_dtype, approx_recip):
    C = gamma_ref.shape[0]
    HW = qkv_s.shape[1]
    Ch = C // num_heads
    b = pl.program_id(0)
    qt = pl.program_id(1)

    # --------- once per batch element: fetch x, GroupNorm, fused qkv matmul ---------
    @pl.when(qt == 0)
    def _():
        # Manual, single-buffered DMA of this batch element's (C, HW) slab.
        cp = pltpu.make_async_copy(x_hbm.at[b], x_scr, x_sem)
        cp.start()
        cp.wait()

        x = x_scr[...].astype(jnp.float32)                       # (C, HW)
        # GroupNorm: lane-axis reduce first, then tiny group-average matmul.
        # sel[i, j] = 1/(Cg*HW) if channels i and j are in the same group.
        s1 = jnp.sum(x, axis=-1, keepdims=True)                  # (C, 1)
        mean = jnp.dot(sel_ref[...], s1,
                       preferred_element_type=jnp.float32)       # (C, 1) group mean
        xc = x - mean
        s2 = jnp.sum(xc * xc, axis=-1, keepdims=True)            # (C, 1) centered
        var = jnp.dot(sel_ref[...], s2,
                      preferred_element_type=jnp.float32)        # (C, 1) group var
        h = xc * jax.lax.rsqrt(var + eps)
        h = h * gamma_ref[...] + beta_ref[...]                   # affine
        hm = h.astype(matmul_dtype)
        # Fused q/k/v 1x1 convs: one (3C, C) @ (C, HW) matmul; hm streamed once,
        # K = C fills the MXU.  1/sqrt(Ch) already folded into the q rows/bias.
        qkv = jnp.dot(wqkv_ref[...], hm, preferred_element_type=jnp.float32)
        qkv_s[...] = (qkv + bqkv_ref[...]).astype(matmul_dtype)

    # ------------- per q-tile: attention + fused proj_out + residual -------------
    start = pl.multiple_of(qt * q_tile, q_tile)
    # NOTE: static unroll over heads (small num_heads); switch to lax.fori_loop
    # if num_heads grows beyond ~4 to bound live ranges.
    for hd in range(num_heads):
        lo = hd * Ch
        qs = qkv_s[pl.ds(lo, Ch), pl.ds(start, q_tile)]          # (Ch, TQ)
        ks = qkv_s[pl.ds(C + lo, Ch), :]                         # (Ch, HW)
        vs = qkv_s[pl.ds(2 * C + lo, Ch), :]                     # (Ch, HW)
        # Logits already transposed: lt[k, q] = sum_c ks[c, k] * qs[c, q], so the
        # PV matmul consumes P in its natural (k, q) layout (no P transpose).
        lt = jax.lax.dot_general(ks, qs, (((0,), (0,)), ((), ())),
                                 preferred_element_type=jnp.float32)   # (HW, TQ)
        lt = lt - jnp.max(lt, axis=0, keepdims=True)
        p = jnp.exp(lt)                                          # f32 softmax stats
        l = jnp.sum(p, axis=0, keepdims=True)                    # (1, TQ)
        av = jnp.dot(vs, p.astype(matmul_dtype),
                     preferred_element_type=jnp.float32)         # (Ch, TQ)
        av = av * pl.reciprocal(l, approx=approx_recip)
        # Park this head's normalized output; the projection is fused below.
        av_s[pl.ds(lo, Ch), :] = av.astype(matmul_dtype)

    # Single K=C output projection instead of num_heads K=Ch matmuls + f32 adds.
    acc = jnp.dot(wp_ref[...], av_s[...],
                  preferred_element_type=jnp.float32)            # (C, TQ)
    x_t = x_scr[:, pl.ds(start, q_tile)].astype(jnp.float32)     # residual from VMEM
    o_ref[0] = (acc + bp_ref[...] + x_t).astype(o_ref.dtype)


def attn_block(x, gamma, beta, w_qkv, b_qkv, w_proj, b_proj, *, num_heads=1,
               eps=1e-6, matmul_dtype=jnp.bfloat16, q_tile=None,
               approx_reciprocal=None, vmem_limit_bytes=None):
    """Pallas implementation of AttnBlock.forward.  x: (B, C, H, W)."""
    B, C, H, W = x.shape
    HW = H * W
    G = min(C // 4, 32)
    Cg = C // G
    assert C % num_heads == 0
    Ch = C // num_heads

    mm_dt = jnp.dtype(matmul_dtype)
    if num_heads > 1:
        pack = 8 * 4 // mm_dt.itemsize              # 8 for f32, 16 for bf16
        assert Ch % pack == 0, (
            f"per-head channels ({Ch}) must be a multiple of {pack} so per-head "
            f"sublane slices stay tile-aligned (no hidden VMEM copies)")

    if q_tile is None:
        # Prefer 256: matches the 256-wide MXU on v6e/v7x and halves grid steps.
        if HW % 256 == 0:
            q_tile = 256
        elif HW % 128 == 0:
            q_tile = 128
        else:
            q_tile = HW
    assert HW % q_tile == 0, "HW must be divisible by the q tile"
    nq = HW // q_tile

    if approx_reciprocal is None:
        # Explicit accuracy knob (not silently tied to matmul dtype).
        approx_reciprocal = mm_dt != jnp.dtype(jnp.float32)

    # Replicate  qkv(...).reshape(B*nh, C//nh, 3, -1).unbind(2)  by reordering the
    # qkv weight rows: (head h, head-channel c, slot j) <- channel h*3*Ch + 3c + j,
    # then stack [q; k; v] into one (3C, C) weight so qt==0 issues a single matmul.
    base = (jnp.arange(num_heads)[:, None] * (3 * Ch)
            + 3 * jnp.arange(Ch)[None, :]).reshape(-1)
    scale = 1.0 / (float(Ch) ** 0.5)
    wq, bq = w_qkv[base + 0] * scale, b_qkv[base + 0] * scale    # fold 1/sqrt(Ch)
    wk, bk = w_qkv[base + 1], b_qkv[base + 1]
    wv, bv = w_qkv[base + 2], b_qkv[base + 2]
    w_qkv3 = jnp.concatenate([wq, wk, wv], axis=0).astype(matmul_dtype)      # (3C, C)
    b_qkv3 = jnp.concatenate([bq, bk, bv], axis=0).reshape(3 * C, 1).astype(jnp.float32)

    # Hoisted group-average selector matrix (no per-step iota/where in kernel).
    gid = jnp.arange(C) // Cg
    sel = (gid[:, None] == gid[None, :]).astype(jnp.float32) / float(Cg * HW)

    f32 = jnp.float32
    params = [sel,
              gamma.reshape(C, 1).astype(f32), beta.reshape(C, 1).astype(f32),
              w_qkv3, b_qkv3,
              w_proj.astype(matmul_dtype), b_proj.reshape(C, 1).astype(f32)]

    # VMEM budget: single-buffered x slab + qkv slab + head-output slab +
    # double-buffered params/output tile + f32 temporaries.  Clamped so the
    # derived default also respects v7x's 64 MiB per-TensorCore VMEM.
    x_sz = jnp.dtype(x.dtype).itemsize
    est = (C * HW * x_sz                          # x scratch (single copy, manual DMA)
           + 3 * C * HW * mm_dt.itemsize          # q/k/v slab scratch
           + C * q_tile * mm_dt.itemsize          # per-tile head-output slab
           + 2 * sum(int(p.size) * jnp.dtype(p.dtype).itemsize for p in params)
           + 2 * C * q_tile * x_sz                # double-buffered output tile
           + max(4 * C * HW * 4,                  # qt==0 f32 temps (h + qkv result)
                 3 * HW * q_tile * 4))            # per-tile f32 logits/probs temps
    if vmem_limit_bytes is None:
        vmem_limit_bytes = int(min(max(est + est // 4 + (2 << 20), 16 << 20), 64 << 20))

    kernel = functools.partial(
        _attn_block_kernel, num_heads=num_heads, eps=eps, q_tile=q_tile,
        matmul_dtype=matmul_dtype, approx_recip=bool(approx_reciprocal))

    x3 = x.reshape(B, C, HW)                      # keep model dtype (no forced upcast)

    out = pl.pallas_call(
        kernel,
        out_shape=jax.ShapeDtypeStruct((B, C, HW), x.dtype),
        grid_spec=pltpu.PrefetchScalarGridSpec(
            num_scalar_prefetch=0,
            grid=(B, nq),
            in_specs=[pl.BlockSpec(memory_space=pl.ANY)]             # raw HBM x
                     + [pl.BlockSpec(p.shape, lambda b, qt: (0, 0))
                        for p in params],
            out_specs=pl.BlockSpec((1, C, q_tile), lambda b, qt: (b, 0, qt)),
            scratch_shapes=[pltpu.VMEM((C, HW), x.dtype),            # x slab (1 buf)
                            pltpu.VMEM((3 * C, HW), matmul_dtype),   # q/k/v slab
                            pltpu.VMEM((C, q_tile), matmul_dtype),   # head outputs
                            pltpu.SemaphoreType.DMA(())],
        ),
        compiler_params=pltpu.CompilerParams(
            dimension_semantics=("parallel", "arbitrary"),
            vmem_limit_bytes=vmem_limit_bytes),
    )(x3, *params)
    return out.reshape(B, C, H, W)


def reference(x, gamma, beta, w_qkv, b_qkv, w_proj, b_proj, *, num_heads=1):
    """Pure-JAX transcription of the PyTorch forward (for verification)."""
    B, C, H, W = x.shape
    G = min(C // 4, 32)
    xr = x.reshape(B, G, (C // G) * H * W)
    mean = xr.mean(-1, keepdims=True)
    var = xr.var(-1, keepdims=True)                        # biased, like torch
    hn = ((xr - mean) / jnp.sqrt(var + 1e-6)).reshape(B, C, H, W)
    hn = hn * gamma.reshape(1, C, 1, 1) + beta.reshape(1, C, 1, 1)

    qkv = (jnp.einsum('oc,bchw->bohw', w_qkv, hn)
           + b_qkv.reshape(1, -1, 1, 1))                   # (B, 3C, H, W)
    nh, Ch = num_heads, C // num_heads
    qkv_r = qkv.reshape(B * nh, Ch, 3, H * W)
    q, k, v = qkv_r[:, :, 0], qkv_r[:, :, 1], qkv_r[:, :, 2]
    w = jax.nn.softmax(
        jnp.einsum('ncq,nck->nqk', q, k / jnp.sqrt(float(Ch))), axis=2)
    a = jnp.einsum('nqk,nck->ncq', w, v).reshape(B, C, H, W)
    return (jnp.einsum('oc,bchw->bohw', w_proj, a)
            + b_proj.reshape(1, -1, 1, 1) + x)


if __name__ == "__main__":
    key = jax.random.PRNGKey(0)

    def make_inputs(k, B, C, H, W):
        k1, k2, k3, k4, k5, k6, k7 = jax.random.split(k, 7)
        x = jax.random.normal(k1, (B, C, H, W), jnp.float32)
        gamma = 1.0 + 0.1 * jax.random.normal(k2, (C,), jnp.float32)
        beta = 0.1 * jax.random.normal(k3, (C,), jnp.float32)
        # 1x1 conv weights (out, in, 1, 1) stored as (out, in).
        # NOTE: the module's proj_out uses init_weight=0 (zero weights); random
        # values here so the full kernel path is exercised.
        w_qkv = 0.1 * jax.random.normal(k4, (3 * C, C), jnp.float32)
        b_qkv = 0.1 * jax.random.normal(k5, (3 * C,), jnp.float32)
        w_proj = 0.1 * jax.random.normal(k6, (C, C), jnp.float32)
        b_proj = 0.1 * jax.random.normal(k7, (C,), jnp.float32)
        return x, gamma, beta, w_qkv, b_qkv, w_proj, b_proj

    configs = [
        # (B, C, H, W, num_heads)
        (2, 8, 16, 16, 1),     # minimal single-head case
        (2, 64, 16, 16, 2),    # multi-head case (exercises fused head projection)
    ]
    for i, (B, C, H, W, nh) in enumerate(configs):
        args = make_inputs(jax.random.fold_in(key, i), B, C, H, W)
        ref = reference(*args, num_heads=nh)

        # f32-operand path (exact reciprocal): tight verification; q_tile=128 so
        # the q-tile carry path (qt > 0 reusing the VMEM slabs) is exercised.
        out_f32 = jax.block_until_ready(
            attn_block(*args, num_heads=nh, matmul_dtype=jnp.float32, q_tile=128))
        err = float(jnp.max(jnp.abs(out_f32 - ref)))
        assert jnp.allclose(out_f32, ref, rtol=2e-3, atol=2e-3), \
            f"config {i}: f32 path max abs err {err}"

        # bf16-MXU path (default q_tile=256): bf16 operands, f32 accumulation.
        out_bf16 = jax.block_until_ready(
            attn_block(*args, num_heads=nh, matmul_dtype=jnp.bfloat16))
        err_b = float(jnp.max(jnp.abs(out_bf16 - ref)))
        assert jnp.allclose(out_bf16, ref, rtol=1e-1, atol=1e-1), \
            f"config {i}: bf16 path max abs err {err_b}"

    print("KERNEL_OK")
</pallas_src>

<mosaic_0001>
module attributes {stable_mosaic.version = 11 : i64} {
  func.func @_attn_block_kernel(%arg0: i32, %arg1: i32, %arg2: memref<2x8x256xf32, #tpu.memory_space<any>>, %arg3: memref<8x8xf32, #tpu.memory_space<vmem>>, %arg4: memref<8x1xf32, #tpu.memory_space<vmem>>, %arg5: memref<8x1xf32, #tpu.memory_space<vmem>>, %arg6: memref<24x8xf32, #tpu.memory_space<vmem>>, %arg7: memref<24x1xf32, #tpu.memory_space<vmem>>, %arg8: memref<8x8xf32, #tpu.memory_space<vmem>>, %arg9: memref<8x1xf32, #tpu.memory_space<vmem>>, %arg10: memref<1x8x128xf32, #tpu.memory_space<vmem>>, %arg11: memref<8x256xf32, #tpu.memory_space<vmem>>, %arg12: memref<24x256xf32, #tpu.memory_space<vmem>>, %arg13: memref<8x128xf32, #tpu.memory_space<vmem>>, %arg14: memref<!tpu.dma_semaphore, #tpu.memory_space<semaphore_mem>>) attributes {dimension_semantics = [#tpu.dimension_semantics<parallel>, #tpu.dimension_semantics<arbitrary>], iteration_bounds = array<i64: 2, 2>, scalar_prefetch = 0 : i64, scratch_operands = 4 : i64, tpu.core_type = #tpu.core_type<tc>, window_params = [{}, {pipeline_mode = #tpu.pipeline_mode<synchronous>, transform_indices = @transform_1, window_bounds = array<i64: 8, 8>}, {pipeline_mode = #tpu.pipeline_mode<synchronous>, transform_indices = @transform_2, window_bounds = array<i64: 8, 1>}, {pipeline_mode = #tpu.pipeline_mode<synchronous>, transform_indices = @transform_3, window_bounds = array<i64: 8, 1>}, {pipeline_mode = #tpu.pipeline_mode<synchronous>, transform_indices = @transform_4, window_bounds = array<i64: 24, 8>}, {pipeline_mode = #tpu.pipeline_mode<synchronous>, transform_indices = @transform_5, window_bounds = array<i64: 24, 1>}, {pipeline_mode = #tpu.pipeline_mode<synchronous>, transform_indices = @transform_6, window_bounds = array<i64: 8, 8>}, {pipeline_mode = #tpu.pipeline_mode<synchronous>, transform_indices = @transform_7, window_bounds = array<i64: 8, 1>}, {transform_indices = @transform_8, window_bounds = array<i64: 1, 8, 128>}]} {
    %c0_i32 = arith.constant 0 : i32
    %0 = arith.cmpi eq, %arg1, %c0_i32 : i32
    %1 = arith.extui %0 : i1 to i32
    %c0_i32_0 = arith.constant 0 : i32
    %2 = arith.cmpi ne, %1, %c0_i32_0 : i32
    scf.if %2 {
      %c0_i32_19 = arith.constant 0 : i32
      %c0_i32_20 = arith.constant 0 : i32
      %34 = tpu.memref_slice %arg2[%arg0, %c0_i32_19, %c0_i32_20] : memref<2x8x256xf32, #tpu.memory_space<any>> -> memref<1x8x256xf32, #tpu.memory_space<any>>
      %35 = tpu.memref_squeeze %34 : memref<1x8x256xf32, #tpu.memory_space<any>> -> memref<8x256xf32, #tpu.memory_space<any>>
      tpu.enqueue_dma source(%35 : memref<8x256xf32, #tpu.memory_space<any>>) target(%arg11 : memref<8x256xf32, #tpu.memory_space<vmem>>) target_semaphore(%arg14 : memref<!tpu.dma_semaphore, #tpu.memory_space<semaphore_mem>>)
      %c0_i32_21 = arith.constant 0 : i32
      %c0_i32_22 = arith.constant 0 : i32
      %36 = tpu.memref_slice %arg2[%arg0, %c0_i32_21, %c0_i32_22] : memref<2x8x256xf32, #tpu.memory_space<any>> -> memref<1x8x256xf32, #tpu.memory_space<any>>
      %37 = tpu.memref_squeeze %36 : memref<1x8x256xf32, #tpu.memory_space<any>> -> memref<8x256xf32, #tpu.memory_space<any>>
      tpu.wait_dma2 semaphore(%arg14 : memref<!tpu.dma_semaphore, #tpu.memory_space<semaphore_mem>>) src(%37 : memref<8x256xf32, #tpu.memory_space<any>>) dst(%arg11 : memref<8x256xf32, #tpu.memory_space<vmem>>)
      %c0_23 = arith.constant 0 : index
      %c0_24 = arith.constant 0 : index
      %38 = vector.load %arg11[%c0_23, %c0_24] : memref<8x256xf32, #tpu.memory_space<vmem>>, vector<8x256xf32>
      %cst_25 = arith.constant dense<0.000000e+00> : vector<8xf32>
      %39 = vector.multi_reduction <add>, %38, %cst_25 [1] : vector<8x256xf32> to vector<8xf32>
      %40 = vector.shape_cast %39 : vector<8xf32> to vector<8x1xf32>
      %c0_26 = arith.constant 0 : index
      %c0_27 = arith.constant 0 : index
      %41 = vector.load %arg3[%c0_26, %c0_27] : memref<8x8xf32, #tpu.memory_space<vmem>>, vector<8x8xf32>
      %cst_28 = arith.constant dense<0.000000e+00> : vector<8x1xf32>
      %42 = tpu.matmul %41, %40, %cst_28 {dimension_numbers = #tpu.dot_dimension_numbers<[1], [0], [0], [1], [0, 0, 1, 1], [], []>} : vector<8x8xf32>, vector<8x1xf32>, vector<8x1xf32> -> vector<8x1xf32>
      %43 = vector.broadcast %42 : vector<8x1xf32> to vector<8x256xf32>
      %44 = arith.subf %38, %43 : vector<8x256xf32>
      %45 = arith.mulf %44, %44 : vector<8x256xf32>
      %cst_29 = arith.constant dense<0.000000e+00> : vector<8xf32>
      %46 = vector.multi_reduction <add>, %45, %cst_29 [1] : vector<8x256xf32> to vector<8xf32>
      %47 = vector.shape_cast %46 : vector<8xf32> to vector<8x1xf32>
      %c0_30 = arith.constant 0 : index
      %c0_31 = arith.constant 0 : index
      %48 = vector.load %arg3[%c0_30, %c0_31] : memref<8x8xf32, #tpu.memory_space<vmem>>, vector<8x8xf32>
      %cst_32 = arith.constant dense<0.000000e+00> : vector<8x1xf32>
      %49 = tpu.matmul %48, %47, %cst_32 {dimension_numbers = #tpu.dot_dimension_numbers<[1], [0], [0], [1], [0, 0, 1, 1], [], []>} : vector<8x8xf32>, vector<8x1xf32>, vector<8x1xf32> -> vector<8x1xf32>
      %cst_33 = arith.constant 9.99999997E-7 : f32
      %50 = vector.broadcast %cst_33 : f32 to vector<8x1xf32>
      %51 = arith.addf %49, %50 : vector<8x1xf32>
      %52 = math.rsqrt %51 : vector<8x1xf32>
      %53 = vector.broadcast %52 : vector<8x1xf32> to vector<8x256xf32>
      %54 = arith.mulf %44, %53 : vector<8x256xf32>
      %c0_34 = arith.constant 0 : index
      %c0_35 = arith.constant 0 : index
      %55 = vector.load %arg4[%c0_34, %c0_35] : memref<8x1xf32, #tpu.memory_space<vmem>>, vector<8x1xf32>
      %56 = vector.broadcast %55 : vector<8x1xf32> to vector<8x256xf32>
      %57 = arith.mulf %54, %56 : vector<8x256xf32>
      %c0_36 = arith.constant 0 : index
      %c0_37 = arith.constant 0 : index
      %58 = vector.load %arg5[%c0_36, %c0_37] : memref<8x1xf32, #tpu.memory_space<vmem>>, vector<8x1xf32>
      %59 = vector.broadcast %58 : vector<8x1xf32> to vector<8x256xf32>
      %60 = arith.addf %57, %59 : vector<8x256xf32>
      %c0_38 = arith.constant 0 : index
      %c0_39 = arith.constant 0 : index
      %61 = vector.load %arg6[%c0_38, %c0_39] : memref<24x8xf32, #tpu.memory_space<vmem>>, vector<24x8xf32>
      %cst_40 = arith.constant dense<0.000000e+00> : vector<24x256xf32>
      %62 = tpu.matmul %61, %60, %cst_40 {dimension_numbers = #tpu.dot_dimension_numbers<[1], [0], [0], [1], [0, 0, 1, 1], [], []>} : vector<24x8xf32>, vector<8x256xf32>, vector<24x256xf32> -> vector<24x256xf32>
      %c0_41 = arith.constant 0 : index
      %c0_42 = arith.constant 0 : index
      %63 = vector.load %arg7[%c0_41, %c0_42] : memref<24x1xf32, #tpu.memory_space<vmem>>, vector<24x1xf32>
      %64 = vector.broadcast %63 : vector<24x1xf32> to vector<24x256xf32>
      %65 = arith.addf %62, %64 : vector<24x256xf32>
      %c0_43 = arith.constant 0 : index
      %c0_44 = arith.constant 0 : index
      %66 = vector.load %arg12[%c0_43, %c0_44] : memref<24x256xf32, #tpu.memory_space<vmem>>, vector<24x256xf32>
      tpu.vector_store %arg12[%c0_43, %c0_44], %65 {strides = array<i32>} : memref<24x256xf32, #tpu.memory_space<vmem>>, vector<24x256xf32>,
    } else {
    }
    %c128_i32 = arith.constant 128 : i32
    %3 = arith.muli %arg1, %c128_i32 : i32
    %4 = tpu.assume_multiple %3, 128 : i32
    %c0 = arith.constant 0 : index
    %5 = arith.index_cast %4 : i32 to index
    %6 = vector.load %arg12[%c0, %5] : memref<24x256xf32, #tpu.memory_space<vmem>>, vector<8x128xf32>
    %c8 = arith.constant 8 : index
    %c0_1 = arith.constant 0 : index
    %7 = vector.load %arg12[%c8, %c0_1] : memref<24x256xf32, #tpu.memory_space<vmem>>, vector<8x256xf32>
    %c16 = arith.constant 16 : index
    %c0_2 = arith.constant 0 : index
    %8 = vector.load %arg12[%c16, %c0_2] : memref<24x256xf32, #tpu.memory_space<vmem>>, vector<8x256xf32>
    %cst = arith.constant dense<0.000000e+00> : vector<256x128xf32>
    %9 = tpu.matmul %7, %6, %cst {dimension_numbers = #tpu.dot_dimension_numbers<[0], [0], [1], [1], [0, 1, 1, 1], [], []>} : vector<8x256xf32>, vector<8x128xf32>, vector<256x128xf32> -> vector<256x128xf32>
    %cst_3 = arith.constant dense<0xFF800000> : vector<128xf32>
    %10 = vector.multi_reduction <maximumf>, %9, %cst_3 [0] : vector<256x128xf32> to vector<128xf32>
    %11 = vector.shape_cast %10 : vector<128xf32> to vector<1x128xf32>
    %12 = vector.broadcast %11 : vector<1x128xf32> to vector<256x128xf32>
    %13 = arith.subf %9, %12 : vector<256x128xf32>
    %14 = math.exp %13 : vector<256x128xf32>
    %cst_4 = arith.constant dense<0.000000e+00> : vector<128xf32>
    %15 = vector.multi_reduction <add>, %14, %cst_4 [0] : vector<256x128xf32> to vector<128xf32>
    %16 = vector.shape_cast %15 : vector<128xf32> to vector<1x128xf32>
    %cst_5 = arith.constant dense<0.000000e+00> : vector<8x128xf32>
    %17 = tpu.matmul %8, %14, %cst_5 {dimension_numbers = #tpu.dot_dimension_numbers<[1], [0], [0], [1], [0, 0, 1, 1], [], []>} : vector<8x256xf32>, vector<256x128xf32>, vector<8x128xf32> -> vector<8x128xf32>
    %18 = tpu.reciprocal %16 : vector<1x128xf32> -> vector<1x128xf32>
    %19 = vector.broadcast %18 : vector<1x128xf32> to vector<8x128xf32>
    %20 = arith.mulf %17, %19 : vector<8x128xf32>
    %c0_6 = arith.constant 0 : index
    %c0_7 = arith.constant 0 : index
    %21 = vector.load %arg13[%c0_6, %c0_7] : memref<8x128xf32, #tpu.memory_space<vmem>>, vector<8x128xf32>
    tpu.vector_store %arg13[%c0_6, %c0_7], %20 {strides = array<i32>} : memref<8x128xf32, #tpu.memory_space<vmem>>, vector<8x128xf32>,
    %c0_8 = arith.constant 0 : index
    %c0_9 = arith.constant 0 : index
    %22 = vector.load %arg8[%c0_8, %c0_9] : memref<8x8xf32, #tpu.memory_space<vmem>>, vector<8x8xf32>
    %c0_10 = arith.constant 0 : index
    %c0_11 = arith.constant 0 : index
    %23 = vector.load %arg13[%c0_10, %c0_11] : memref<8x128xf32, #tpu.memory_space<vmem>>, vector<8x128xf32>
    %cst_12 = arith.constant dense<0.000000e+00> : vector<8x128xf32>
    %24 = tpu.matmul %22, %23, %cst_12 {dimension_numbers = #tpu.dot_dimension_numbers<[1], [0], [0], [1], [0, 0, 1, 1], [], []>} : vector<8x8xf32>, vector<8x128xf32>, vector<8x128xf32> -> vector<8x128xf32>
    %c0_13 = arith.constant 0 : index
    %25 = arith.index_cast %4 : i32 to index
    %26 = vector.load %arg11[%c0_13, %25] : memref<8x256xf32, #tpu.memory_space<vmem>>, vector<8x128xf32>
    %c0_14 = arith.constant 0 : index
    %c0_15 = arith.constant 0 : index
    %27 = vector.load %arg9[%c0_14, %c0_15] : memref<8x1xf32, #tpu.memory_space<vmem>>, vector<8x1xf32>
    %28 = vector.broadcast %27 : vector<8x1xf32> to vector<8x128xf32>
    %29 = arith.addf %24, %28 : vector<8x128xf32>
    %30 = arith.addf %29, %26 : vector<8x128xf32>
    %c0_16 = arith.constant 0 : index
    %c0_17 = arith.constant 0 : index
    %c0_18 = arith.constant 0 : index
    %31 = vector.load %arg10[%c0_16, %c0_17, %c0_18] : memref<1x8x128xf32, #tpu.memory_space<vmem>>, vector<1x8x128xf32>
    %32 = vector.shape_cast %31 : vector<1x8x128xf32> to vector<8x128xf32>
    %33 = vector.shape_cast %30 : vector<8x128xf32> to vector<1x8x128xf32>
    tpu.vector_store %arg10[%c0_16, %c0_17, %c0_18], %33 {strides = array<i32>} : memref<1x8x128xf32, #tpu.memory_space<vmem>>, vector<1x8x128xf32>,
    return
  }
  func.func @transform_1(%arg0: i32, %arg1: i32) -> (i32, i32) {
    %c0_i32 = arith.constant 0 : i32
    %c0_i32_0 = arith.constant 0 : i32
    %c0_i32_1 = arith.constant 0 : i32
    return %c0_i32, %c0_i32_0 : i32, i32
  }
  func.func @transform_2(%arg0: i32, %arg1: i32) -> (i32, i32) {
    %c0_i32 = arith.constant 0 : i32
    %c0_i32_0 = arith.constant 0 : i32
    %c0_i32_1 = arith.constant 0 : i32
    return %c0_i32, %c0_i32_0 : i32, i32
  }
  func.func @transform_3(%arg0: i32, %arg1: i32) -> (i32, i32) {
    %c0_i32 = arith.constant 0 : i32
    %c0_i32_0 = arith.constant 0 : i32
    %c0_i32_1 = arith.constant 0 : i32
    return %c0_i32, %c0_i32_0 : i32, i32
  }
  func.func @transform_4(%arg0: i32, %arg1: i32) -> (i32, i32) {
    %c0_i32 = arith.constant 0 : i32
    %c0_i32_0 = arith.constant 0 : i32
    %c0_i32_1 = arith.constant 0 : i32
    return %c0_i32, %c0_i32_0 : i32, i32
  }
  func.func @transform_5(%arg0: i32, %arg1: i32) -> (i32, i32) {
    %c0_i32 = arith.constant 0 : i32
    %c0_i32_0 = arith.constant 0 : i32
    %c0_i32_1 = arith.constant 0 : i32
    return %c0_i32, %c0_i32_0 : i32, i32
  }
  func.func @transform_6(%arg0: i32, %arg1: i32) -> (i32, i32) {
    %c0_i32 = arith.constant 0 : i32
    %c0_i32_0 = arith.constant 0 : i32
    %c0_i32_1 = arith.constant 0 : i32
    return %c0_i32, %c0_i32_0 : i32, i32
  }
  func.func @transform_7(%arg0: i32, %arg1: i32) -> (i32, i32) {
    %c0_i32 = arith.constant 0 : i32
    %c0_i32_0 = arith.constant 0 : i32
    %c0_i32_1 = arith.constant 0 : i32
    return %c0_i32, %c0_i32_0 : i32, i32
  }
  func.func @transform_8(%arg0: i32, %arg1: i32) -> (i32, i32, i32) {
    %c0_i32 = arith.constant 0 : i32
    %c0_i32_0 = arith.constant 0 : i32
    return %arg0, %c0_i32, %arg1 : i32, i32, i32
  }
}

</mosaic_0001>

<llo_original>
// kernel: tpu_custom_call.1
$region0: #{tpu_custom_call.1}
  #allocation0 [shape = 'u32[]', space=smem, size = 0x4, offset = 0x4, fixed_abs, tag = 'smem constant byte address 0x4 - core index']
  #allocation1 [shape = 'u32[144,128]{1,0:T(1,128)}', space=vmem, size = 0x12000, scoped, tag = 'internal scratch']
  #allocation2 [shape = 'f32[8,256]{1,0:T(8,128)}', space=vmem, size = 0x2000, scoped, tag = 'scratch operand']
  #allocation3 [shape = 'f32[24,256]{1,0:T(8,128)}', space=vmem, size = 0x6000, scoped, tag = 'scratch operand']
  #allocation4 [shape = 'f32[8,128]{1,0:T(8,128)}', space=vmem, size = 0x1000, scoped, tag = 'scratch operand']
  #allocation5 [shape = 's32[1]{0}', space=sflag, size = 0x4, scoped, tag = 'scratch operand']
  #allocation8 [shape = 's32[]', space=sflag, size = 0x4, offset = 0, fixed_abs, tag = 'sflag constant byte address 0x0 - dummy sync flag']
  %s0 = inlined_call_operand.vmem [shape: f32[2,8,256], index: 0, kind: input, shape index: {}]
  %s1 = inlined_call_operand.vmem [shape: f32[8,8], index: 1, kind: input, shape index: {}]
  %s2 = inlined_call_operand.vmem [shape: f32[8,1], index: 2, kind: input, shape index: {}]
  %s3 = inlined_call_operand.vmem [shape: f32[8,1], index: 3, kind: input, shape index: {}]
  %s4 = inlined_call_operand.vmem [shape: f32[24,8], index: 4, kind: input, shape index: {}]
  %s5 = inlined_call_operand.vmem [shape: f32[24,1], index: 5, kind: input, shape index: {}]
  %s6 = inlined_call_operand.vmem [shape: f32[8,8], index: 6, kind: input, shape index: {}]
  %s7 = inlined_call_operand.vmem [shape: f32[8,1], index: 7, kind: input, shape index: {}]
  %s8 = inlined_call_operand.hbm [shape: f32[2,8,256], index: 8, kind: output, shape index: {}]
  %s9 = sld [smem:[#allocation0]]
  $region99: #{tpu_custom_call.1} parent=0
    _
  %s11 = ssub.s32 1, %s9
  %s12 = scalar_select 0, %s11, %s9
  $region1: #{tpu_custom_call.1} parent=0
    #allocation6 [shape = 'u8[8192]{0}', space=vmem, size = 0x2000, scoped, tag = 'output window, operand 0']
    #allocation7 [shape = 's32[2]{0}', space=sflag, size = 0x8, scoped, tag = 'scoped memory for tpu_custom_call.1']
    %13 = vsyncpa [#allocation7], 0
    %s14 = scalar_lea.sflag [#allocation7], 1
    %15 = vsyncpa %s14, 0
    loop: start=0, step=1, limit=6
    $region2: #{tpu_custom_call.1} parent=1 // loop_pre_header
      _
    $region3: #{tpu_custom_call.1} parent=1 // loop_header
      %s17 = sphi 0, %s21
      %p18 = scmp.ge.s32.totalorder %s17, 6
      %s24 = sphi 0, %s36
      %s25 = sphi 0, %s32
      %s26 = sphi 0, %s24
      %s27 = sphi 0, %s25
      %s28 = sphi 0, %s26
      %s29 = sphi 0, %s27
      %s37 = sphi 0, %s37
      %s39 = sphi 0, %s37
      %s40 = sphi 0, %s39
      %s54 = sphi 0, %s40
      %s58 = sphi 0, %s58
      %s60 = sphi 0, %s58
      %s61 = sphi 0, %s60
      %s75 = sphi 0, %s61
      %s79 = sphi 0, %s79
      %s81 = sphi 0, %s79
      %s82 = sphi 0, %s81
      %s96 = sphi 0, %s82
      %s100 = sphi 0, %s100
      %s102 = sphi 0, %s100
      %s103 = sphi 0, %s102
      %s117 = sphi 0, %s103
      %s121 = sphi 0, %s121
      %s123 = sphi 0, %s121
      %s124 = sphi 0, %s123
      %s138 = sphi 0, %s124
      %s142 = sphi 0, %s142
      %s144 = sphi 0, %s142
      %s145 = sphi 0, %s144
      %s159 = sphi 0, %s145
      %s163 = sphi 0, %s163
      %s165 = sphi 0, %s163
      %s166 = sphi 0, %s165
      %s180 = sphi 0, %s166
      %s188 = sphi 0, %s190
      %s191 = sphi 0, %s188
      %s192 = sphi 0, %s191
      %s208 = sphi 0, %s192
    $region4: #{tpu_custom_call.1} parent=1 // loop_header_branch
      %20 = sbr.rel (%p18) target = $region8
    $region5: #{tpu_custom_call.1} parent=1 // loop_body
      %s22 = ssub.s32 %s17, 1
      %s23 = ssub.s32 %s17, 2
      %s30 = sadd.s32 1, %s25
      %p31 = scmp.ge.s32.totalorder %s30, 2
      %s32 = scalar_select %p31, 0, %s30
      %s33 = sadd.s32 1, %s24
      %s34 = scalar_select %p31, %s33, %s24
      %p35 = scmp.ge.s32.totalorder %s34, 2
      %s36 = scalar_select %p35, 0, %s34
      %s38 = sadd.s32 %s37, 1
      %p41 = scmp.eq.s32.totalorder %s17, 3
      %p42 = scmp.ne.s32.totalorder %s37, %s39
      %p43 = scmp.eq.s32.totalorder %s17, 0
      %p44 = por %p42, %p43
      %p45 = scmp.ne.s32.totalorder %s37, %s39
      %p46 = scmp.eq.s32.totalorder %s22, 3
      %p47 = por %p45, %p46
      %p48 = scmp.ne.s32.totalorder %s39, %s40
      %p49 = scmp.eq.s32.totalorder %s22, 0
      %p50 = por %p48, %p49
      %p51 = scmp.ne.s32.totalorder %s39, %s40
      %p52 = scmp.eq.s32.totalorder %s23, 3
      %p53 = por %p51, %p52
      %p55 = scmp.ne.s32.totalorder %s40, %s54
      %p56 = scmp.eq.s32.totalorder %s23, 0
      %p57 = por %p55, %p56
      %s59 = sadd.s32 %s58, 1
      %p62 = scmp.eq.s32.totalorder %s17, 3
      %p63 = scmp.ne.s32.totalorder %s58, %s60
      %p64 = scmp.eq.s32.totalorder %s17, 0
      %p65 = por %p63, %p64
      %p66 = scmp.ne.s32.totalorder %s58, %s60
      %p67 = scmp.eq.s32.totalorder %s22, 3
      %p68 = por %p66, %p67
      %p69 = scmp.ne.s32.totalorder %s60, %s61
      %p70 = scmp.eq.s32.totalorder %s22, 0
      %p71 = por %p69, %p70
      %p72 = scmp.ne.s32.totalorder %s60, %s61
      %p73 = scmp.eq.s32.totalorder %s23, 3
      %p74 = por %p72, %p73
      %p76 = scmp.ne.s32.totalorder %s61, %s75
      %p77 = scmp.eq.s32.totalorder %s23, 0
      %p78 = por %p76, %p77
      %s80 = sadd.s32 %s79, 1
      %p83 = scmp.eq.s32.totalorder %s17, 3
      %p84 = scmp.ne.s32.totalorder %s79, %s81
      %p85 = scmp.eq.s32.totalorder %s17, 0
      %p86 = por %p84, %p85
      %p87 = scmp.ne.s32.totalorder %s79, %s81
      %p88 = scmp.eq.s32.totalorder %s22, 3
      %p89 = por %p87, %p88
      %p90 = scmp.ne.s32.totalorder %s81, %s82
      %p91 = scmp.eq.s32.totalorder %s22, 0
      %p92 = por %p90, %p91
      %p93 = scmp.ne.s32.totalorder %s81, %s82
      %p94 = scmp.eq.s32.totalorder %s23, 3
      %p95 = por %p93, %p94
      %p97 = scmp.ne.s32.totalorder %s82, %s96
      %p98 = scmp.eq.s32.totalorder %s23, 0
      %p99 = por %p97, %p98
      %s101 = sadd.s32 %s100, 1
      %p104 = scmp.eq.s32.totalorder %s17, 3
      %p105 = scmp.ne.s32.totalorder %s100, %s102
      %p106 = scmp.eq.s32.totalorder %s17, 0
      %p107 = por %p105, %p106
      %p108 = scmp.ne.s32.totalorder %s100, %s102
      %p109 = scmp.eq.s32.totalorder %s22, 3
      %p110 = por %p108, %p109
      %p111 = scmp.ne.s32.totalorder %s102, %s103
      %p112 = scmp.eq.s32.totalorder %s22, 0
      %p113 = por %p111, %p112
      %p114 = scmp.ne.s32.totalorder %s102, %s103
      %p115 = scmp.eq.s32.totalorder %s23, 3
      %p116 = por %p114, %p115
      %p118 = scmp.ne.s32.totalorder %s103, %s117
      %p119 = scmp.eq.s32.totalorder %s23, 0
      %p120 = por %p118, %p119
      %s122 = sadd.s32 %s121, 1
      %p125 = scmp.eq.s32.totalorder %s17, 3
      %p126 = scmp.ne.s32.totalorder %s121, %s123
      %p127 = scmp.eq.s32.totalorder %s17, 0
      %p128 = por %p126, %p127
      %p129 = scmp.ne.s32.totalorder %s121, %s123
      %p130 = scmp.eq.s32.totalorder %s22, 3
      %p131 = por %p129, %p130
      %p132 = scmp.ne.s32.totalorder %s123, %s124
      %p133 = scmp.eq.s32.totalorder %s22, 0
      %p134 = por %p132, %p133
      %p135 = scmp.ne.s32.totalorder %s123, %s124
      %p136 = scmp.eq.s32.totalorder %s23, 3
      %p137 = por %p135, %p136
      %p139 = scmp.ne.s32.totalorder %s124, %s138
      %p140 = scmp.eq.s32.totalorder %s23, 0
      %p141 = por %p139, %p140
      %s143 = sadd.s32 %s142, 1
      %p146 = scmp.eq.s32.totalorder %s17, 3
      %p147 = scmp.ne.s32.totalorder %s142, %s144
      %p148 = scmp.eq.s32.totalorder %s17, 0
      %p149 = por %p147, %p148
      %p150 = scmp.ne.s32.totalorder %s142, %s144
      %p151 = scmp.eq.s32.totalorder %s22, 3
      %p152 = por %p150, %p151
      %p153 = scmp.ne.s32.totalorder %s144, %s145
      %p154 = scmp.eq.s32.totalorder %s22, 0
      %p155 = por %p153, %p154
      %p156 = scmp.ne.s32.totalorder %s144, %s145
      %p157 = scmp.eq.s32.totalorder %s23, 3
      %p158 = por %p156, %p157
      %p160 = scmp.ne.s32.totalorder %s145, %s159
      %p161 = scmp.eq.s32.totalorder %s23, 0
      %p162 = por %p160, %p161
      %s164 = sadd.s32 %s163, 1
      %p167 = scmp.eq.s32.totalorder %s17, 3
      %p168 = scmp.ne.s32.totalorder %s163, %s165
      %p169 = scmp.eq.s32.totalorder %s17, 0
      %p170 = por %p168, %p169
      %p171 = scmp.ne.s32.totalorder %s163, %s165
      %p172 = scmp.eq.s32.totalorder %s22, 3
      %p173 = por %p171, %p172
      %p174 = scmp.ne.s32.totalorder %s165, %s166
      %p175 = scmp.eq.s32.totalorder %s22, 0
      %p176 = por %p174, %p175
      %p177 = scmp.ne.s32.totalorder %s165, %s166
      %p178 = scmp.eq.s32.totalorder %s23, 3
      %p179 = por %p177, %p178
      %p181 = scmp.ne.s32.totalorder %s166, %s180
      %p182 = scmp.eq.s32.totalorder %s23, 0
      %p183 = por %p181, %p182
      %s184 = ssub.s32 %s24, %s36
      %s185 = ssub.s32 %s25, %s32
      %s186 = sor.u32 %s184, %s185
      %p187 = scmp.eq.s32.totalorder %s186, 0
      %s189 = sadd.s32 %s188, 1
      %s190 = scalar_select %p187, %s188, %s189
      %p193 = pneg %p187
      %p194 = scmp.eq.s32.totalorder %s17, 3
      %p195 = por %p193, %p194
      %p196 = scmp.ne.s32.totalorder %s188, %s191
      %p197 = scmp.eq.s32.totalorder %s17, 0
      %p198 = por %p196, %p197
      %p199 = scmp.ne.s32.totalorder %s188, %s191
      %p200 = scmp.eq.s32.totalorder %s22, 3
      %p201 = por %p199, %p200
      %p202 = scmp.ne.s32.totalorder %s191, %s192
      %p203 = scmp.eq.s32.totalorder %s22, 0
      %p204 = por %p202, %p203
      %p205 = scmp.ne.s32.totalorder %s191, %s192
      %p206 = scmp.eq.s32.totalorder %s23, 3
      %p207 = por %p205, %p206
      %p209 = scmp.ne.s32.totalorder %s192, %s208
      %p210 = scmp.eq.s32.totalorder %s23, 0
      %p211 = por %p209, %p210
      %p212 = scmp.le.s32.totalorder 1, %s17
      %p213 = scmp.lt.s32.totalorder %s17, 5
      %p214 = pnand %p212, %p213
      %p215 = pneg %p214
      // Predicated region
      $region9: #{tpu_custom_call.1} parent=5 // pred_check
        _
      $region10: #{tpu_custom_call.1} parent=5 // pred_check_branch
        %217 = sbr.rel (%p214) target = $region12
      $region11: #{tpu_custom_call.1} parent=5 // pred_region
        %s218 = ssub.s32 %s17, 1
        // Predicated region
        $region13: #{tpu_custom_call.1} parent=11 // pred_check
          %p219 = pneg %p50
        $region14: #{tpu_custom_call.1} parent=11 // pred_check_branch
          %221 = sbr.rel (%p219) target = $region16
        $region15: #{tpu_custom_call.1} parent=11 // pred_region
          _
        $region16: #{tpu_custom_call.1} parent=11 // pred_fallthru
          _
        // Predicated region
        $region17: #{tpu_custom_call.1} parent=11 // pred_check
          %p222 = pneg %p71
        $region18: #{tpu_custom_call.1} parent=11 // pred_check_branch
          %224 = sbr.rel (%p222) target = $region20
        $region19: #{tpu_custom_call.1} parent=11 // pred_region
          _
        $region20: #{tpu_custom_call.1} parent=11 // pred_fallthru
          _
        // Predicated region
        $region21: #{tpu_custom_call.1} parent=11 // pred_check
          %p225 = pneg %p92
        $region22: #{tpu_custom_call.1} parent=11 // pred_check_branch
          %227 = sbr.rel (%p225) target = $region24
        $region23: #{tpu_custom_call.1} parent=11 // pred_region
          _
        $region24: #{tpu_custom_call.1} parent=11 // pred_fallthru
          _
        // Predicated region
        $region25: #{tpu_custom_call.1} parent=11 // pred_check
          %p228 = pneg %p113
        $region26: #{tpu_custom_call.1} parent=11 // pred_check_branch
          %230 = sbr.rel (%p228) target = $region28
        $region27: #{tpu_custom_call.1} parent=11 // pred_region
          _
        $region28: #{tpu_custom_call.1} parent=11 // pred_fallthru
          _
        // Predicated region
        $region29: #{tpu_custom_call.1} parent=11 // pred_check
          %p231 = pneg %p134
        $region30: #{tpu_custom_call.1} parent=11 // pred_check_branch
          %233 = sbr.rel (%p231) target = $region32
        $region31: #{tpu_custom_call.1} parent=11 // pred_region
          _
        $region32: #{tpu_custom_call.1} parent=11 // pred_fallthru
          _
        // Predicated region
        $region33: #{tpu_custom_call.1} parent=11 // pred_check
          %p234 = pneg %p155
        $region34: #{tpu_custom_call.1} parent=11 // pred_check_branch
          %236 = sbr.rel (%p234) target = $region36
        $region35: #{tpu_custom_call.1} parent=11 // pred_region
          _
        $region36: #{tpu_custom_call.1} parent=11 // pred_fallthru
          _
        // Predicated region
        $region37: #{tpu_custom_call.1} parent=11 // pred_check
          %p237 = pneg %p176
        $region38: #{tpu_custom_call.1} parent=11 // pred_check_branch
          %239 = sbr.rel (%p237) target = $region40
        $region39: #{tpu_custom_call.1} parent=11 // pred_region
          _
        $region40: #{tpu_custom_call.1} parent=11 // pred_fallthru
          _
      $region12: #{tpu_custom_call.1} parent=5 // pred_fallthru
        _
      %p240 = scmp.lt.s32.totalorder %s17, 4
      // Predicated region
      $region41: #{tpu_custom_call.1} parent=5 // pred_check
        %p241 = pneg %p240
      $region42: #{tpu_custom_call.1} parent=5 // pred_check_branch
        %243 = sbr.rel (%p241) target = $region44
      $region43: #{tpu_custom_call.1} parent=5 // pred_region
        _
      $region44: #{tpu_custom_call.1} parent=5 // pred_fallthru
        _
      %p244 = scmp.le.s32.totalorder 1, %s17
      %p245 = scmp.lt.s32.totalorder %s17, 5
      %p246 = pnand %p244, %p245
      %p247 = pneg %p246
      // Predicated region
      $region45: #{tpu_custom_call.1} parent=5 // pred_check
        _
      $region46: #{tpu_custom_call.1} parent=5 // pred_check_branch
        %249 = sbr.rel (%p246) target = $region48
      $region47: #{tpu_custom_call.1} parent=5 // pred_region
        %s250 = ssub.s32 %s17, 1
        %p251 = pneg %p50
        %p252 = pneg %p47
        %p253 = pneg %p71
        %p254 = pneg %p68
        %p255 = pneg %p92
        %p256 = pneg %p89
        %p257 = pneg %p113
        %p258 = pneg %p110
        %p259 = pneg %p134
        %p260 = pneg %p131
        %p261 = pneg %p155
        %p262 = pneg %p152
        %p263 = pneg %p176
        %p264 = pneg %p173
        %p265 = pneg %p204
        %p266 = pneg %p201
        %s267 = sand.u32 %s191, 1
        %s268 = scalar_lea.sflag [#allocation7], %s267
        %s269 = sand.u32 %s191, 1
        %s270 = smul.addr %s269, 8
        %s271 = scalar_lea.vmem [#allocation6], %s270
        %p272 = scmp.eq.s32.totalorder %s27, 0
        // Predicated region
        $region49: #{tpu_custom_call.1} parent=47 // pred_check
          %p273 = pneg %p272
        $region50: #{tpu_custom_call.1} parent=47 // pred_check_branch
          %275 = sbr.rel (%p273) target = $region52
        $region51: #{tpu_custom_call.1} parent=47 // pred_region
          %s276 = smul.u32 %s26, 2
          %s277 = smul.addr %s276, 8
          %s278 = scalar_lea.vmem %s0, %s277
          %p280 = scmp.lt.u32.totalorder 16, 8
          %p281 = pneg %p280
          // Predicated region
          $region53: #{tpu_custom_call.1} parent=51 // pred_check
            _
          $region54: #{tpu_custom_call.1} parent=51 // pred_check_branch
            %283 = sbr.rel (%p280) target = $region56
          $region55: #{tpu_custom_call.1} parent=51 // pred_region
            %s299 = sand.u32 16, 7
            %p300 = scmp.eq.s32.totalorder %s299, 0
            // Predicated region
            $region68: #{tpu_custom_call.1} parent=55 // pred_check
              %p301 = pneg %p300
            $region69: #{tpu_custom_call.1} parent=55 // pred_check_branch
              %303 = sbr.rel (%p301) target = $region71
            $region70: #{tpu_custom_call.1} parent=55 // pred_region
              loop: start=0, step=1, limit=1
              $region72: #{tpu_custom_call.1} parent=70 // loop_pre_header
                _
              $region73: #{tpu_custom_call.1} parent=70 // loop_header
                %s305 = sphi 0, %s309
                %p306 = scmp.ge.s32.totalorder %s305, 1
                %s310 = sphi %s278, %s278
                %s311 = sphi [#allocation2], [#allocation2]
              $region74: #{tpu_custom_call.1} parent=70 // loop_header_branch
                %308 = sbr.rel (%p306) target = $region78
              $region75: #{tpu_custom_call.1} parent=70 // loop_body
                %v312 = vld [vmem:[%s310] sm:$0xff]
                %313 = vst [vmem:[%s311] sm:$0xff] %v312
                %v314 = vld [vmem:[%s310 + $0x8] sm:$0xff]
                %315 = vst [vmem:[%s311 + $0x8] sm:$0xff] %v314
              $region76: #{tpu_custom_call.1} parent=70 // loop_footer
                %s309 = sadd.s32 1, %s305
              $region77: #{tpu_custom_call.1} parent=70 // loop_footer_branch
                %304 = sbr.rel target = $region73
              $region78: #{tpu_custom_call.1} parent=70 // loop_exit
                _
            $region71: #{tpu_custom_call.1} parent=55 // pred_fallthru
              _
            %p316 = pneg %p300
            // Predicated region
            $region79: #{tpu_custom_call.1} parent=55 // pred_check
              _
            $region80: #{tpu_custom_call.1} parent=55 // pred_check_branch
              %318 = sbr.rel (%p300) target = $region82
            $region81: #{tpu_custom_call.1} parent=55 // pred_region
              %s319 = sand.u32 16, 7
            $region82: #{tpu_custom_call.1} parent=55 // pred_fallthru
              _
          $region56: #{tpu_custom_call.1} parent=51 // pred_fallthru
            _
          // Predicated region
          $region57: #{tpu_custom_call.1} parent=51 // pred_check
            %p284 = pneg %p280
          $region58: #{tpu_custom_call.1} parent=51 // pred_check_branch
            %286 = sbr.rel (%p284) target = $region60
          $region59: #{tpu_custom_call.1} parent=51 // pred_region
            %s287 = sshll.u32 1, 16
            %s288 = ssub.s32 %s287, 1
            loop: start=0, step=1, limit=1
            $region61: #{tpu_custom_call.1} parent=59 // loop_pre_header
              _
            $region62: #{tpu_custom_call.1} parent=59 // loop_header
              %s290 = sphi 0, %s294
              %p291 = scmp.ge.s32.totalorder %s290, 1
              %s295 = sphi %s278, %s278
              %s296 = sphi [#allocation2], [#allocation2]
            $region63: #{tpu_custom_call.1} parent=59 // loop_header_branch
              %293 = sbr.rel (%p291) target = $region67
            $region64: #{tpu_custom_call.1} parent=59 // loop_body
              %v297 = vld [vmem:[%s295] sm:%s288]
              %298 = vst [vmem:[%s296] sm:%s288] %v297
            $region65: #{tpu_custom_call.1} parent=59 // loop_footer
              %s294 = sadd.s32 1, %s290
            $region66: #{tpu_custom_call.1} parent=59 // loop_footer_branch
              %289 = sbr.rel target = $region62
            $region67: #{tpu_custom_call.1} parent=59 // loop_exit
              _
          $region60: #{tpu_custom_call.1} parent=51 // pred_fallthru
            _
          // Predicated region
          $region83: #{tpu_custom_call.1} parent=51 // pred_check
            _
          $region84: #{tpu_custom_call.1} parent=51 // pred_check_branch
            %322 = sbr.rel (0) target = $region86
          $region85: #{tpu_custom_call.1} parent=51 // pred_region
            %323 = vsyncadd [#allocation5], 256
          $region86: #{tpu_custom_call.1} parent=51 // pred_fallthru
            _
          %s324 = smul.u32 8, 1
          %s325 = smul.u32 %s324, 2
          %s326 = sshll.u32 %s325, 4
          %327 = dma.done [#allocation5], %s326
          %v328 = vld [vmem:[#allocation2] sm:$0xff]
          %v329 = vld [vmem:[#allocation2 + $0x8] sm:$0xff]
          %v330 = vadd.f32 %v328, %v329
          %331 = vadd.xlane.f32.xlu0 %v330
          %v332 = vpop.xlane.xlu0 %331
          %v333 = vld [vmem:[%s1] sm:$0xff]
          %vm334 = vcmask 64512
          %v336 = vsel %vm334, %v333, 0
          %338 = vmatprep.subr.mxu0 0.0
          %339 = vmatpush1.msra.mxu0 0.0
          %340 = vmatprep.subr.mxu0 0.0
          %341 = vmatpush1.msra.mxu0 0.0
          %342 = vmatprep.subr.mxu0 0.0
          %343 = vmatpush1.msra.mxu0 0.0
          %344 = vmatprep.subr.mxu0 0.0
          %345 = vmatpush1.msra.mxu0 0.0
          %346 = vmatprep.subr.mxu0 0.0
          %347 = vmatpush1.msra.mxu0 0.0
          %348 = vmatprep.subr.mxu0 0.0
          %349 = vmatpush1.msra.mxu0 0.0
          %350 = vmatprep.subr.mxu0 0.0
          %351 = vmatpush1.msra.mxu0 0.0
          %352 = vmatprep.subr.mxu0 0.0
          %353 = vmatpush1.msra.mxu0 0.0
          %354 = vmatprep.subr.mxu0 0.0
          %355 = vmatpush1.msra.mxu0 0.0
          %356 = vmatprep.subr.mxu0 0.0
          %357 = vmatpush1.msra.mxu0 0.0
          %358 = vmatprep.subr.mxu0 0.0
          %359 = vmatpush1.msra.mxu0 0.0
          %360 = vmatprep.subr.mxu0 0.0
          %361 = vmatpush1.msra.mxu0 0.0
          %362 = vmatprep.subr.mxu0 0.0
          %363 = vmatpush1.msra.mxu0 0.0
          %364 = vmatprep.subr.mxu0 0.0
          %365 = vmatpush1.msra.mxu0 0.0
          %366 = vmatprep.subr.mxu0 0.0
          %367 = vmatpush1.msra.mxu0 0.0
          %368 = vmatprep.subr.mxu0 0.0
          %369 = vmatpush1.msra.mxu0 %v332
          %370 = vmatprep.subr.mxu0 0.0
          %371 = vmatpush2.msra.mxu0 0.0
          %372 = vmatprep.subr.mxu0 0.0
          %373 = vmatpush2.msra.mxu0 0.0
          %374 = vmatprep.subr.mxu0 0.0
          %375 = vmatpush2.msra.mxu0 0.0
          %376 = vmatprep.subr.mxu0 0.0
          %377 = vmatpush2.msra.mxu0 0.0
          %378 = vmatprep.subr.mxu0 0.0
          %379 = vmatpush2.msra.mxu0 0.0
          %380 = vmatprep.subr.mxu0 0.0
          %381 = vmatpush2.msra.mxu0 0.0
          %382 = vmatprep.subr.mxu0 0.0
          %383 = vmatpush2.msra.mxu0 0.0
          %384 = vmatprep.subr.mxu0 0.0
          %385 = vmatpush2.msra.mxu0 0.0
          %386 = vmatprep.subr.mxu0 0.0
          %387 = vmatpush2.msra.mxu0 0.0
          %388 = vmatprep.subr.mxu0 0.0
          %389 = vmatpush2.msra.mxu0 0.0
          %390 = vmatprep.subr.mxu0 0.0
          %391 = vmatpush2.msra.mxu0 0.0
          %392 = vmatprep.subr.mxu0 0.0
          %393 = vmatpush2.msra.mxu0 0.0
          %394 = vmatprep.subr.mxu0 0.0
          %395 = vmatpush2.msra.mxu0 0.0
          %396 = vmatprep.subr.mxu0 0.0
          %397 = vmatpush2.msra.mxu0 0.0
          %398 = vmatprep.subr.mxu0 0.0
          %399 = vmatpush2.msra.mxu0 0.0
          %400 = vmatprep.subr.mxu0 0.0
          %401 = vmatpush2.msra.mxu0 0.0
          %402 = vmatprep.mubr.f32.mxu0 0.0
          %403 = vmatmul.mubr.f32.gmra.mxu0 %v336
          %v404 = vpop.f32.mrf.mxu0
          %v405 = vadd.f32 0.0, %v404
          %v406 = vpop.f32.mrf.mxu0
          %407 = vdwg.mxu0
          %409 = vset.pattern.permute.xlu0 0
          %410 = vperm.xlu0 %409, %v405
          %v411 = vpop.permute.xlu0 %410
          %v413 = vsub.f32 %v328, %v411
          %v414 = vsub.f32 %v329, %v411
          %v415 = vmul.f32 %v413, %v413
          %v416 = vmul.f32 %v414, %v414
          %v417 = vadd.f32 %v415, %v416
          %418 = vadd.xlane.f32.xlu0 %v417
          %v419 = vpop.xlane.xlu0 %418
          %420 = vmatprep.subr.mxu0 0.0
          %421 = vmatpush1.msra.mxu0 0.0
          %422 = vmatprep.subr.mxu0 0.0
          %423 = vmatpush1.msra.mxu0 0.0
          %424 = vmatprep.subr.mxu0 0.0
          %425 = vmatpush1.msra.mxu0 0.0
          %426 = vmatprep.subr.mxu0 0.0
          %427 = vmatpush1.msra.mxu0 0.0
          %428 = vmatprep.subr.mxu0 0.0
          %429 = vmatpush1.msra.mxu0 0.0
          %430 = vmatprep.subr.mxu0 0.0
          %431 = vmatpush1.msra.mxu0 0.0
          %432 = vmatprep.subr.mxu0 0.0
          %433 = vmatpush1.msra.mxu0 0.0
          %434 = vmatprep.subr.mxu0 0.0
          %435 = vmatpush1.msra.mxu0 0.0
          %436 = vmatprep.subr.mxu0 0.0
          %437 = vmatpush1.msra.mxu0 0.0
          %438 = vmatprep.subr.mxu0 0.0
          %439 = vmatpush1.msra.mxu0 0.0
          %440 = vmatprep.subr.mxu0 0.0
          %441 = vmatpush1.msra.mxu0 0.0
          %442 = vmatprep.subr.mxu0 0.0
          %443 = vmatpush1.msra.mxu0 0.0
          %444 = vmatprep.subr.mxu0 0.0
          %445 = vmatpush1.msra.mxu0 0.0
          %446 = vmatprep.subr.mxu0 0.0
          %447 = vmatpush1.msra.mxu0 0.0
          %448 = vmatprep.subr.mxu0 0.0
          %449 = vmatpush1.msra.mxu0 0.0
          %450 = vmatprep.subr.mxu0 0.0
          %451 = vmatpush1.msra.mxu0 %v419
          %452 = vmatprep.subr.mxu0 0.0
          %453 = vmatpush2.msra.mxu0 0.0
          %454 = vmatprep.subr.mxu0 0.0
          %455 = vmatpush2.msra.mxu0 0.0
          %456 = vmatprep.subr.mxu0 0.0
          %457 = vmatpush2.msra.mxu0 0.0
          %458 = vmatprep.subr.mxu0 0.0
          %459 = vmatpush2.msra.mxu0 0.0
          %460 = vmatprep.subr.mxu0 0.0
          %461 = vmatpush2.msra.mxu0 0.0
          %462 = vmatprep.subr.mxu0 0.0
          %463 = vmatpush2.msra.mxu0 0.0
          %464 = vmatprep.subr.mxu0 0.0
          %465 = vmatpush2.msra.mxu0 0.0
          %466 = vmatprep.subr.mxu0 0.0
          %467 = vmatpush2.msra.mxu0 0.0
          %468 = vmatprep.subr.mxu0 0.0
          %469 = vmatpush2.msra.mxu0 0.0
          %470 = vmatprep.subr.mxu0 0.0
          %471 = vmatpush2.msra.mxu0 0.0
          %472 = vmatprep.subr.mxu0 0.0
          %473 = vmatpush2.msra.mxu0 0.0
          %474 = vmatprep.subr.mxu0 0.0
          %475 = vmatpush2.msra.mxu0 0.0
          %476 = vmatprep.subr.mxu0 0.0
          %477 = vmatpush2.msra.mxu0 0.0
          %478 = vmatprep.subr.mxu0 0.0
          %479 = vmatpush2.msra.mxu0 0.0
          %480 = vmatprep.subr.mxu0 0.0
          %481 = vmatpush2.msra.mxu0 0.0
          %482 = vmatprep.subr.mxu0 0.0
          %483 = vmatpush2.msra.mxu0 0.0
          %484 = vmatprep.mubr.f32.mxu0 0.0
          %485 = vmatmul.mubr.f32.gmra.mxu0 %v336
          %v486 = vpop.f32.mrf.mxu0
          %v487 = vadd.f32 1e-06, %v486
          %v488 = vpop.f32.mrf.mxu0
          %489 = vdwg.mxu0
          %v490 = vrsqrt.pop %v487
          %492 = vset.pattern.permute.xlu0 0
          %493 = vperm.xlu0 %492, %v490
          %v494 = vpop.permute.xlu0 %493
          %v496 = vmul.f32 %v413, %v494
          %v497 = vmul.f32 %v414, %v494
          %v498 = vld [vmem:[%s2] sm:$0xff]
          %500 = vset.pattern.permute.xlu0 0
          %501 = vperm.xlu0 %500, %v498
          %v502 = vpop.permute.xlu0 %501
          %v504 = vmul.f32 %v496, %v502
          %v505 = vmul.f32 %v497, %v502
          %v506 = vld [vmem:[%s3] sm:$0xff]
          %508 = vset.pattern.permute.xlu0 0
          %509 = vperm.xlu0 %508, %v506
          %v510 = vpop.permute.xlu0 %509
          %v512 = vadd.f32 %v504, %v510
          %v513 = vadd.f32 %v505, %v510
          %v514 = vld [vmem:[%s4] sm:$0xff]
          %v515 = vld [vmem:[%s4 + $0x8] sm:$0xff]
          %v516 = vld [vmem:[%s4 + $0x10] sm:$0xff]
          %v517 = vld [vmem:[%s5] sm:$0xff]
          %v518 = vld [vmem:[%s5 + $0x8] sm:$0xff]
          %v519 = vld [vmem:[%s5 + $0x10] sm:$0xff]
          %521 = vset.pattern.permute.xlu0 0
          %522 = vperm.xlu0 %521, %v517
          %v523 = vpop.permute.xlu0 %522
          %526 = vset.pattern.permute.xlu0 0
          %527 = vperm.xlu0 %526, %v518
          %v528 = vpop.permute.xlu0 %527
          %531 = vset.pattern.permute.xlu0 0
          %532 = vperm.xlu0 %531, %v519
          %v533 = vpop.permute.xlu0 %532
          %v536 = vsel %vm334, %v514, 0
          %v539 = vsel %vm334, %v515, 0
          %v542 = vsel %vm334, %v516, 0
          %544 = vmatprep.subr.mxu0 0.0
          %545 = vmatpush1.msra.mxu0 0.0
          %546 = vmatprep.subr.mxu0 0.0
          %547 = vmatpush1.msra.mxu0 0.0
          %548 = vmatprep.subr.mxu0 0.0
          %549 = vmatpush1.msra.mxu0 0.0
          %550 = vmatprep.subr.mxu0 0.0
          %551 = vmatpush1.msra.mxu0 0.0
          %552 = vmatprep.subr.mxu0 0.0
          %553 = vmatpush1.msra.mxu0 0.0
          %554 = vmatprep.subr.mxu0 0.0
          %555 = vmatpush1.msra.mxu0 0.0
          %556 = vmatprep.subr.mxu0 0.0
          %557 = vmatpush1.msra.mxu0 0.0
          %558 = vmatprep.subr.mxu0 0.0
          %559 = vmatpush1.msra.mxu0 0.0
          %560 = vmatprep.subr.mxu0 0.0
          %561 = vmatpush1.msra.mxu0 0.0
          %562 = vmatprep.subr.mxu0 0.0
          %563 = vmatpush1.msra.mxu0 0.0
          %564 = vmatprep.subr.mxu0 0.0
          %565 = vmatpush1.msra.mxu0 0.0
          %566 = vmatprep.subr.mxu0 0.0
          %567 = vmatpush1.msra.mxu0 0.0
          %568 = vmatprep.subr.mxu0 0.0
          %569 = vmatpush1.msra.mxu0 0.0
          %570 = vmatprep.subr.mxu0 0.0
          %571 = vmatpush1.msra.mxu0 0.0
          %572 = vmatprep.subr.mxu0 0.0
          %573 = vmatpush1.msra.mxu0 0.0
          %574 = vmatprep.subr.mxu0 %v513
          %575 = vmatpush1.msra.mxu0 %v512
          %576 = vmatprep.subr.mxu0 0.0
          %577 = vmatpush2.msra.mxu0 0.0
          %578 = vmatprep.subr.mxu0 0.0
          %579 = vmatpush2.msra.mxu0 0.0
          %580 = vmatprep.subr.mxu0 0.0
          %581 = vmatpush2.msra.mxu0 0.0
          %582 = vmatprep.subr.mxu0 0.0
          %583 = vmatpush2.msra.mxu0 0.0
          %584 = vmatprep.subr.mxu0 0.0
          %585 = vmatpush2.msra.mxu0 0.0
          %586 = vmatprep.subr.mxu0 0.0
          %587 = vmatpush2.msra.mxu0 0.0
          %588 = vmatprep.subr.mxu0 0.0
          %589 = vmatpush2.msra.mxu0 0.0
          %590 = vmatprep.subr.mxu0 0.0
          %591 = vmatpush2.msra.mxu0 0.0
          %592 = vmatprep.subr.mxu0 0.0
          %593 = vmatpush2.msra.mxu0 0.0
          %594 = vmatprep.subr.mxu0 0.0
          %595 = vmatpush2.msra.mxu0 0.0
          %596 = vmatprep.subr.mxu0 0.0
          %597 = vmatpush2.msra.mxu0 0.0
          %598 = vmatprep.subr.mxu0 0.0
          %599 = vmatpush2.msra.mxu0 0.0
          %600 = vmatprep.subr.mxu0 0.0
          %601 = vmatpush2.msra.mxu0 0.0
          %602 = vmatprep.subr.mxu0 0.0
          %603 = vmatpush2.msra.mxu0 0.0
          %604 = vmatprep.subr.mxu0 0.0
          %605 = vmatpush2.msra.mxu0 0.0
          %606 = vmatprep.subr.mxu0 0.0
          %607 = vmatpush2.msra.mxu0 0.0
          %608 = vmatprep.mubr.f32.mxu0 0.0
          %609 = vmatmul.mubr.f32.gmra.mxu0 %v536
          %v610 = vpop.f32.mrf.mxu0
          %v611 = vadd.f32 %v523, %v610
          %v612 = vpop.f32.mrf.mxu0
          %v613 = vadd.f32 %v523, %v612
          %614 = vmatprep.mubr.f32.mxu0 0.0
          %615 = vmatmul.mubr.f32.gmra.mxu0 %v539
          %v616 = vpop.f32.mrf.mxu0
          %v617 = vadd.f32 %v528, %v616
          %v618 = vpop.f32.mrf.mxu0
          %v619 = vadd.f32 %v528, %v618
          %620 = vmatprep.mubr.f32.mxu0 0.0
          %621 = vmatmul.mubr.f32.gmra.mxu0 %v542
          %v622 = vpop.f32.mrf.mxu0
          %v623 = vadd.f32 %v533, %v622
          %v624 = vpop.f32.mrf.mxu0
          %v625 = vadd.f32 %v533, %v624
          %626 = vdwg.mxu0
          %627 = vst [vmem:[#allocation3] sm:$0xff] %v611
          %628 = vst [vmem:[#allocation3 + $0x8] sm:$0xff] %v613
          %629 = vst [vmem:[#allocation3 + $0x10] sm:$0xff] %v617
          %630 = vst [vmem:[#allocation3 + $0x18] sm:$0xff] %v619
          %631 = vst [vmem:[#allocation3 + $0x20] sm:$0xff] %v623
          %632 = vst [vmem:[#allocation3 + $0x28] sm:$0xff] %v625
        $region52: #{tpu_custom_call.1} parent=47 // pred_fallthru
          _
        %s633 = smul.u32 %s27, 128
        %s634 = sshra.s32 %s633, 7
        %s635 = sand.u32 %s633, 127
        %s636 = smul.addr %s634, 8
        %s637 = scalar_lea.vmem [#allocation3], %s636
        %v638 = vld [vmem:[%s637] sm:$0xff]
        %v639 = vld [vmem:[#allocation3 + $0x10] sm:$0xff]
        %v640 = vld [vmem:[#allocation3 + $0x18] sm:$0xff]
        %v641 = vld [vmem:[#allocation3 + $0x20] sm:$0xff]
        %v642 = vld [vmem:[#allocation3 + $0x28] sm:$0xff]
        %643 = vxpose.xlu0.b32.start [1/16] %v639, 128
        %644 = vxpose.xlu0.b32.cont [2/16] 0.0, 128
        %645 = vxpose.xlu0.b32.cont [3/16] 0.0, 128
        %646 = vxpose.xlu0.b32.cont [4/16] 0.0, 128
        %647 = vxpose.xlu0.b32.cont [5/16] 0.0, 128
        %648 = vxpose.xlu0.b32.cont [6/16] 0.0, 128
        %649 = vxpose.xlu0.b32.cont [7/16] 0.0, 128
        %650 = vxpose.xlu0.b32.cont [8/16] 0.0, 128
        %651 = vxpose.xlu0.b32.cont [9/16] 0.0, 128
        %652 = vxpose.xlu0.b32.cont [10/16] 0.0, 128
        %653 = vxpose.xlu0.b32.cont [11/16] 0.0, 128
        %654 = vxpose.xlu0.b32.cont [12/16] 0.0, 128
        %655 = vxpose.xlu0.b32.cont [13/16] 0.0, 128
        %656 = vxpose.xlu0.b32.cont [14/16] 0.0, 128
        %657 = vxpose.xlu0.b32.cont [15/16] 0.0, 128
        %658 = vxpose.xlu0.b32.end [16/16] 0.0, 128
        %v659 = vpop.trf.xlu0
        %v660 = vpop.trf.xlu0
        %v661 = vpop.trf.xlu0
        %v662 = vpop.trf.xlu0
        %v663 = vpop.trf.xlu0
        %v664 = vpop.trf.xlu0
        %v665 = vpop.trf.xlu0
        %v666 = vpop.trf.xlu0
        %v667 = vpop.trf.xlu0
        %v668 = vpop.trf.xlu0
        %v669 = vpop.trf.xlu0
        %v670 = vpop.trf.xlu0
        %v671 = vpop.trf.xlu0
        %v672 = vpop.trf.xlu0
        %v673 = vpop.trf.xlu0
        %v674 = vpop.trf.xlu0
        %675 = vxpose.xlu0.b32.start [1/16] %v640, 128
        %676 = vxpose.xlu0.b32.cont [2/16] 0.0, 128
        %677 = vxpose.xlu0.b32.cont [3/16] 0.0, 128
        %678 = vxpose.xlu0.b32.cont [4/16] 0.0, 128
        %679 = vxpose.xlu0.b32.cont [5/16] 0.0, 128
        %680 = vxpose.xlu0.b32.cont [6/16] 0.0, 128
        %681 = vxpose.xlu0.b32.cont [7/16] 0.0, 128
        %682 = vxpose.xlu0.b32.cont [8/16] 0.0, 128
        %683 = vxpose.xlu0.b32.cont [9/16] 0.0, 128
        %684 = vxpose.xlu0.b32.cont [10/16] 0.0, 128
        %685 = vxpose.xlu0.b32.cont [11/16] 0.0, 128
        %686 = vxpose.xlu0.b32.cont [12/16] 0.0, 128
        %687 = vxpose.xlu0.b32.cont [13/16] 0.0, 128
        %688 = vxpose.xlu0.b32.cont [14/16] 0.0, 128
        %689 = vxpose.xlu0.b32.cont [15/16] 0.0, 128
        %690 = vxpose.xlu0.b32.end [16/16] 0.0, 128
        %v691 = vpop.trf.xlu0
        %v692 = vpop.trf.xlu0
        %v693 = vpop.trf.xlu0
        %v694 = vpop.trf.xlu0
        %v695 = vpop.trf.xlu0
        %v696 = vpop.trf.xlu0
        %v697 = vpop.trf.xlu0
        %v698 = vpop.trf.xlu0
        %v699 = vpop.trf.xlu0
        %v700 = vpop.trf.xlu0
        %v701 = vpop.trf.xlu0
        %v702 = vpop.trf.xlu0
        %v703 = vpop.trf.xlu0
        %v704 = vpop.trf.xlu0
        %v705 = vpop.trf.xlu0
        %v706 = vpop.trf.xlu0
        %vm707 = vcmask 64512
        %v709 = vsel %vm707, %v659, 0
        %v712 = vsel %vm707, %v660, 0
        %v715 = vsel %vm707, %v661, 0
        %v718 = vsel %vm707, %v662, 0
        %v721 = vsel %vm707, %v663, 0
        %v724 = vsel %vm707, %v664, 0
        %v727 = vsel %vm707, %v665, 0
        %v730 = vsel %vm707, %v666, 0
        %v733 = vsel %vm707, %v667, 0
        %v736 = vsel %vm707, %v668, 0
        %v739 = vsel %vm707, %v669, 0
        %v742 = vsel %vm707, %v670, 0
        %v745 = vsel %vm707, %v671, 0
        %v748 = vsel %vm707, %v672, 0
        %v751 = vsel %vm707, %v673, 0
        %v754 = vsel %vm707, %v674, 0
        %v757 = vsel %vm707, %v691, 0
        %v760 = vsel %vm707, %v692, 0
        %v763 = vsel %vm707, %v693, 0
        %v766 = vsel %vm707, %v694, 0
        %v769 = vsel %vm707, %v695, 0
        %v772 = vsel %vm707, %v696, 0
        %v775 = vsel %vm707, %v697, 0
        %v778 = vsel %vm707, %v698, 0
        %v781 = vsel %vm707, %v699, 0
        %v784 = vsel %vm707, %v700, 0
        %v787 = vsel %vm707, %v701, 0
        %v790 = vsel %vm707, %v702, 0
        %v793 = vsel %vm707, %v703, 0
        %v796 = vsel %vm707, %v704, 0
        %v799 = vsel %vm707, %v705, 0
        %v802 = vsel %vm707, %v706, 0
        %804 = vmatprep.subr.mxu0 0.0
        %805 = vmatpush1.msra.mxu0 0.0
        %806 = vmatprep.subr.mxu0 0.0
        %807 = vmatpush1.msra.mxu0 0.0
        %808 = vmatprep.subr.mxu0 0.0
        %809 = vmatpush1.msra.mxu0 0.0
        %810 = vmatprep.subr.mxu0 0.0
        %811 = vmatpush1.msra.mxu0 0.0
        %812 = vmatprep.subr.mxu0 0.0
        %813 = vmatpush1.msra.mxu0 0.0
        %814 = vmatprep.subr.mxu0 0.0
        %815 = vmatpush1.msra.mxu0 0.0
        %816 = vmatprep.subr.mxu0 0.0
        %817 = vmatpush1.msra.mxu0 0.0
        %818 = vmatprep.subr.mxu0 0.0
        %819 = vmatpush1.msra.mxu0 0.0
        %820 = vmatprep.subr.mxu0 0.0
        %821 = vmatpush1.msra.mxu0 0.0
        %822 = vmatprep.subr.mxu0 0.0
        %823 = vmatpush1.msra.mxu0 0.0
        %824 = vmatprep.subr.mxu0 0.0
        %825 = vmatpush1.msra.mxu0 0.0
        %826 = vmatprep.subr.mxu0 0.0
        %827 = vmatpush1.msra.mxu0 0.0
        %828 = vmatprep.subr.mxu0 0.0
        %829 = vmatpush1.msra.mxu0 0.0
        %830 = vmatprep.subr.mxu0 0.0
        %831 = vmatpush1.msra.mxu0 0.0
        %832 = vmatprep.subr.mxu0 0.0
        %833 = vmatpush1.msra.mxu0 0.0
        %834 = vmatprep.subr.mxu0 0.0
        %835 = vmatpush1.msra.mxu0 %v638
        %836 = vmatprep.subr.mxu0 0.0
        %837 = vmatpush2.msra.mxu0 0.0
        %838 = vmatprep.subr.mxu0 0.0
        %839 = vmatpush2.msra.mxu0 0.0
        %840 = vmatprep.subr.mxu0 0.0
        %841 = vmatpush2.msra.mxu0 0.0
        %842 = vmatprep.subr.mxu0 0.0
        %843 = vmatpush2.msra.mxu0 0.0
        %844 = vmatprep.subr.mxu0 0.0
        %845 = vmatpush2.msra.mxu0 0.0
        %846 = vmatprep.subr.mxu0 0.0
        %847 = vmatpush2.msra.mxu0 0.0
        %848 = vmatprep.subr.mxu0 0.0
        %849 = vmatpush2.msra.mxu0 0.0
        %850 = vmatprep.subr.mxu0 0.0
        %851 = vmatpush2.msra.mxu0 0.0
        %852 = vmatprep.subr.mxu0 0.0
        %853 = vmatpush2.msra.mxu0 0.0
        %854 = vmatprep.subr.mxu0 0.0
        %855 = vmatpush2.msra.mxu0 0.0
        %856 = vmatprep.subr.mxu0 0.0
        %857 = vmatpush2.msra.mxu0 0.0
        %858 = vmatprep.subr.mxu0 0.0
        %859 = vmatpush2.msra.mxu0 0.0
        %860 = vmatprep.subr.mxu0 0.0
        %861 = vmatpush2.msra.mxu0 0.0
        %862 = vmatprep.subr.mxu0 0.0
        %863 = vmatpush2.msra.mxu0 0.0
        %864 = vmatprep.subr.mxu0 0.0
        %865 = vmatpush2.msra.mxu0 0.0
        %866 = vmatprep.subr.mxu0 0.0
        %867 = vmatpush2.msra.mxu0 0.0
        %868 = vmatprep.mubr.f32.mxu0 0.0
        %869 = vmatmul.mubr.f32.gmra.mxu0 %v709
        %v870 = vpop.f32.mrf.mxu0
        %v871 = vadd.f32 0.0, %v870
        %v872 = vpop.f32.mrf.mxu0
        %873 = vmatprep.mubr.f32.mxu0 0.0
        %874 = vmatmul.mubr.f32.gmra.mxu0 %v712
        %v875 = vpop.f32.mrf.mxu0
        %v876 = vadd.f32 0.0, %v875
        %v877 = vpop.f32.mrf.mxu0
        %878 = vmatprep.mubr.f32.mxu0 0.0
        %879 = vmatmul.mubr.f32.gmra.mxu0 %v715
        %v880 = vpop.f32.mrf.mxu0
        %v881 = vadd.f32 0.0, %v880
        %v882 = vpop.f32.mrf.mxu0
        %883 = vmatprep.mubr.f32.mxu0 0.0
        %884 = vmatmul.mubr.f32.gmra.mxu0 %v718
        %v885 = vpop.f32.mrf.mxu0
        %v886 = vadd.f32 0.0, %v885
        %v887 = vpop.f32.mrf.mxu0
        %888 = vmatprep.mubr.f32.mxu0 0.0
        %889 = vmatmul.mubr.f32.gmra.mxu0 %v721
        %v890 = vpop.f32.mrf.mxu0
        %v891 = vadd.f32 0.0, %v890
        %v892 = vpop.f32.mrf.mxu0
        %893 = vmatprep.mubr.f32.mxu0 0.0
        %894 = vmatmul.mubr.f32.gmra.mxu0 %v724
        %v895 = vpop.f32.mrf.mxu0
        %v896 = vadd.f32 0.0, %v895
        %v897 = vpop.f32.mrf.mxu0
        %898 = vmatprep.mubr.f32.mxu0 0.0
        %899 = vmatmul.mubr.f32.gmra.mxu0 %v727
        %v900 = vpop.f32.mrf.mxu0
        %v901 = vadd.f32 0.0, %v900
        %v902 = vpop.f32.mrf.mxu0
        %903 = vmatprep.mubr.f32.mxu0 0.0
        %904 = vmatmul.mubr.f32.gmra.mxu0 %v730
        %v905 = vpop.f32.mrf.mxu0
        %v906 = vadd.f32 0.0, %v905
        %v907 = vpop.f32.mrf.mxu0
        %908 = vmatprep.mubr.f32.mxu0 0.0
        %909 = vmatmul.mubr.f32.gmra.mxu0 %v733
        %v910 = vpop.f32.mrf.mxu0
        %v911 = vadd.f32 0.0, %v910
        %v912 = vpop.f32.mrf.mxu0
        %913 = vmatprep.mubr.f32.mxu0 0.0
        %914 = vmatmul.mubr.f32.gmra.mxu0 %v736
        %v915 = vpop.f32.mrf.mxu0
        %v916 = vadd.f32 0.0, %v915
        %v917 = vpop.f32.mrf.mxu0
        %918 = vmatprep.mubr.f32.mxu0 0.0
        %919 = vmatmul.mubr.f32.gmra.mxu0 %v739
        %v920 = vpop.f32.mrf.mxu0
        %v921 = vadd.f32 0.0, %v920
        %v922 = vpop.f32.mrf.mxu0
        %923 = vmatprep.mubr.f32.mxu0 0.0
        %924 = vmatmul.mubr.f32.gmra.mxu0 %v742
        %v925 = vpop.f32.mrf.mxu0
        %v926 = vadd.f32 0.0, %v925
        %v927 = vpop.f32.mrf.mxu0
        %928 = vmatprep.mubr.f32.mxu0 0.0
        %929 = vmatmul.mubr.f32.gmra.mxu0 %v745
        %v930 = vpop.f32.mrf.mxu0
        %v931 = vadd.f32 0.0, %v930
        %v932 = vpop.f32.mrf.mxu0
        %933 = vmatprep.mubr.f32.mxu0 0.0
        %934 = vmatmul.mubr.f32.gmra.mxu0 %v748
        %v935 = vpop.f32.mrf.mxu0
        %v936 = vadd.f32 0.0, %v935
        %v937 = vpop.f32.mrf.mxu0
        %938 = vmatprep.mubr.f32.mxu0 0.0
        %939 = vmatmul.mubr.f32.gmra.mxu0 %v751
        %v940 = vpop.f32.mrf.mxu0
        %v941 = vadd.f32 0.0, %v940
        %v942 = vpop.f32.mrf.mxu0
        %943 = vmatprep.mubr.f32.mxu0 0.0
        %944 = vmatmul.mubr.f32.gmra.mxu0 %v754
        %v945 = vpop.f32.mrf.mxu0
        %v946 = vadd.f32 0.0, %v945
        %v947 = vpop.f32.mrf.mxu0
        %948 = vmatprep.mubr.f32.mxu0 0.0
        %949 = vmatmul.mubr.f32.gmra.mxu0 %v757
        %v950 = vpop.f32.mrf.mxu0
        %v951 = vadd.f32 0.0, %v950
        %v952 = vpop.f32.mrf.mxu0
        %953 = vmatprep.mubr.f32.mxu0 0.0
        %954 = vmatmul.mubr.f32.gmra.mxu0 %v760
        %v955 = vpop.f32.mrf.mxu0
        %v956 = vadd.f32 0.0, %v955
        %v957 = vpop.f32.mrf.mxu0
        %958 = vmatprep.mubr.f32.mxu0 0.0
        %959 = vmatmul.mubr.f32.gmra.mxu0 %v763
        %v960 = vpop.f32.mrf.mxu0
        %v961 = vadd.f32 0.0, %v960
        %v962 = vpop.f32.mrf.mxu0
        %963 = vmatprep.mubr.f32.mxu0 0.0
        %964 = vmatmul.mubr.f32.gmra.mxu0 %v766
        %v965 = vpop.f32.mrf.mxu0
        %v966 = vadd.f32 0.0, %v965
        %v967 = vpop.f32.mrf.mxu0
        %968 = vmatprep.mubr.f32.mxu0 0.0
        %969 = vmatmul.mubr.f32.gmra.mxu0 %v769
        %v970 = vpop.f32.mrf.mxu0
        %v971 = vadd.f32 0.0, %v970
        %v972 = vpop.f32.mrf.mxu0
        %973 = vmatprep.mubr.f32.mxu0 0.0
        %974 = vmatmul.mubr.f32.gmra.mxu0 %v772
        %v975 = vpop.f32.mrf.mxu0
        %v976 = vadd.f32 0.0, %v975
        %v977 = vpop.f32.mrf.mxu0
        %978 = vmatprep.mubr.f32.mxu0 0.0
        %979 = vmatmul.mubr.f32.gmra.mxu0 %v775
        %v980 = vpop.f32.mrf.mxu0
        %v981 = vadd.f32 0.0, %v980
        %v982 = vpop.f32.mrf.mxu0
        %983 = vmatprep.mubr.f32.mxu0 0.0
        %984 = vmatmul.mubr.f32.gmra.mxu0 %v778
        %v985 = vpop.f32.mrf.mxu0
        %v986 = vadd.f32 0.0, %v985
        %v987 = vpop.f32.mrf.mxu0
        %988 = vmatprep.mubr.f32.mxu0 0.0
        %989 = vmatmul.mubr.f32.gmra.mxu0 %v781
        %v990 = vpop.f32.mrf.mxu0
        %v991 = vadd.f32 0.0, %v990
        %v992 = vpop.f32.mrf.mxu0
        %993 = vmatprep.mubr.f32.mxu0 0.0
        %994 = vmatmul.mubr.f32.gmra.mxu0 %v784
        %v995 = vpop.f32.mrf.mxu0
        %v996 = vadd.f32 0.0, %v995
        %v997 = vpop.f32.mrf.mxu0
        %998 = vmatprep.mubr.f32.mxu0 0.0
        %999 = vmatmul.mubr.f32.gmra.mxu0 %v787
        %v1000 = vpop.f32.mrf.mxu0
        %v1001 = vadd.f32 0.0, %v1000
        %v1002 = vpop.f32.mrf.mxu0
        %1003 = vmatprep.mubr.f32.mxu0 0.0
        %1004 = vmatmul.mubr.f32.gmra.mxu0 %v790
        %v1005 = vpop.f32.mrf.mxu0
        %v1006 = vadd.f32 0.0, %v1005
        %v1007 = vpop.f32.mrf.mxu0
        %1008 = vmatprep.mubr.f32.mxu0 0.0
        %1009 = vmatmul.mubr.f32.gmra.mxu0 %v793
        %v1010 = vpop.f32.mrf.mxu0
        %v1011 = vadd.f32 0.0, %v1010
        %v1012 = vpop.f32.mrf.mxu0
        %1013 = vmatprep.mubr.f32.mxu0 0.0
        %1014 = vmatmul.mubr.f32.gmra.mxu0 %v796
        %v1015 = vpop.f32.mrf.mxu0
        %v1016 = vadd.f32 0.0, %v1015
        %v1017 = vpop.f32.mrf.mxu0
        %1018 = vmatprep.mubr.f32.mxu0 0.0
        %1019 = vmatmul.mubr.f32.gmra.mxu0 %v799
        %v1020 = vpop.f32.mrf.mxu0
        %v1021 = vadd.f32 0.0, %v1020
        %v1022 = vpop.f32.mrf.mxu0
        %1023 = vmatprep.mubr.f32.mxu0 0.0
        %1024 = vmatmul.mubr.f32.gmra.mxu0 %v802
        %v1025 = vpop.f32.mrf.mxu0
        %v1026 = vadd.f32 0.0, %v1025
        %v1027 = vpop.f32.mrf.mxu0
        %1028 = vdwg.mxu0
        %v1029 = vmax.f32 %v871, %v891
        %v1030 = vmax.f32 %v876, %v896
        %v1031 = vmax.f32 %v881, %v901
        %v1032 = vmax.f32 %v886, %v906
        %v1033 = vmax.f32 %v1029, %v911
        %v1034 = vmax.f32 %v1030, %v916
        %v1035 = vmax.f32 %v1031, %v921
        %v1036 = vmax.f32 %v1032, %v926
        %v1037 = vmax.f32 %v1033, %v931
        %v1038 = vmax.f32 %v1034, %v936
        %v1039 = vmax.f32 %v1035, %v941
        %v1040 = vmax.f32 %v1036, %v946
        %v1041 = vmax.f32 %v1037, %v951
        %v1042 = vmax.f32 %v1038, %v956
        %v1043 = vmax.f32 %v1039, %v961
        %v1044 = vmax.f32 %v1040, %v966
        %v1045 = vmax.f32 %v1041, %v971
        %v1046 = vmax.f32 %v1042, %v976
        %v1047 = vmax.f32 %v1043, %v981
        %v1048 = vmax.f32 %v1044, %v986
        %v1049 = vmax.f32 %v1045, %v991
        %v1050 = vmax.f32 %v1046, %v996
        %v1051 = vmax.f32 %v1047, %v1001
        %v1052 = vmax.f32 %v1048, %v1006
        %v1053 = vmax.f32 %v1049, %v1011
        %v1054 = vmax.f32 %v1050, %v1016
        %v1055 = vmax.f32 %v1051, %v1021
        %v1056 = vmax.f32 %v1052, %v1026
        %v1057 = vmax.f32 %v1053, %v1054
        %v1058 = vmax.f32 %v1055, %v1056
        %v1059 = vmax.f32 %v1057, %v1058
        %v1060 = vrot.slane %v1059, 4
        %v1061 = vmax.f32 %v1059, %v1060
        %v1062 = vrot.slane %v1061, 2
        %v1063 = vmax.f32 %v1061, %v1062
        %v1064 = vrot.slane %v1063, 1
        %v1065 = vmax.f32 %v1063, %v1064
        %v1066 = vsub.f32 %v871, %v1065
        %v1067 = vsub.f32 %v876, %v1065
        %v1068 = vsub.f32 %v881, %v1065
        %v1069 = vsub.f32 %v886, %v1065
        %v1070 = vsub.f32 %v891, %v1065
        %v1071 = vsub.f32 %v896, %v1065
        %v1072 = vsub.f32 %v901, %v1065
        %v1073 = vsub.f32 %v906, %v1065
        %v1074 = vsub.f32 %v911, %v1065
        %v1075 = vsub.f32 %v916, %v1065
        %v1076 = vsub.f32 %v921, %v1065
        %v1077 = vsub.f32 %v926, %v1065
        %v1078 = vsub.f32 %v931, %v1065
        %v1079 = vsub.f32 %v936, %v1065
        %v1080 = vsub.f32 %v941, %v1065
        %v1081 = vsub.f32 %v946, %v1065
        %v1082 = vsub.f32 %v951, %v1065
        %v1083 = vsub.f32 %v956, %v1065
        %v1084 = vsub.f32 %v961, %v1065
        %v1085 = vsub.f32 %v966, %v1065
        %v1086 = vsub.f32 %v971, %v1065
        %v1087 = vsub.f32 %v976, %v1065
        %v1088 = vsub.f32 %v981, %v1065
        %v1089 = vsub.f32 %v986, %v1065
        %v1090 = vsub.f32 %v991, %v1065
        %v1091 = vsub.f32 %v996, %v1065
        %v1092 = vsub.f32 %v1001, %v1065
        %v1093 = vsub.f32 %v1006, %v1065
        %v1094 = vsub.f32 %v1011, %v1065
        %v1095 = vsub.f32 %v1016, %v1065
        %v1096 = vsub.f32 %v1021, %v1065
        %v1097 = vsub.f32 %v1026, %v1065
        %v1098 = vmul.f32 %v1066, 1.442695
        %v1099 = vpow.pop %v1098
        %v1100 = vmul.f32 %v1067, 1.442695
        %v1101 = vpow.pop %v1100
        %v1102 = vmul.f32 %v1068, 1.442695
        %v1103 = vpow.pop %v1102
        %v1104 = vmul.f32 %v1069, 1.442695
        %v1105 = vpow.pop %v1104
        %v1106 = vmul.f32 %v1070, 1.442695
        %v1107 = vpow.pop %v1106
        %v1108 = vmul.f32 %v1071, 1.442695
        %v1109 = vpow.pop %v1108
        %v1110 = vmul.f32 %v1072, 1.442695
        %v1111 = vpow.pop %v1110
        %v1112 = vmul.f32 %v1073, 1.442695
        %v1113 = vpow.pop %v1112
        %v1114 = vmul.f32 %v1074, 1.442695
        %v1115 = vpow.pop %v1114
        %v1116 = vmul.f32 %v1075, 1.442695
        %v1117 = vpow.pop %v1116
        %v1118 = vmul.f32 %v1076, 1.442695
        %v1119 = vpow.pop %v1118
        %v1120 = vmul.f32 %v1077, 1.442695
        %v1121 = vpow.pop %v1120
        %v1122 = vmul.f32 %v1078, 1.442695
        %v1123 = vpow.pop %v1122
        %v1124 = vmul.f32 %v1079, 1.442695
        %v1125 = vpow.pop %v1124
        %v1126 = vmul.f32 %v1080, 1.442695
        %v1127 = vpow.pop %v1126
        %v1128 = vmul.f32 %v1081, 1.442695
        %v1129 = vpow.pop %v1128
        %v1130 = vmul.f32 %v1082, 1.442695
        %v1131 = vpow.pop %v1130
        %v1132 = vmul.f32 %v1083, 1.442695
        %v1133 = vpow.pop %v1132
        %v1134 = vmul.f32 %v1084, 1.442695
        %v1135 = vpow.pop %v1134
        %v1136 = vmul.f32 %v1085, 1.442695
        %v1137 = vpow.pop %v1136
        %v1138 = vmul.f32 %v1086, 1.442695
        %v1139 = vpow.pop %v1138
        %v1140 = vmul.f32 %v1087, 1.442695
        %v1141 = vpow.pop %v1140
        %v1142 = vmul.f32 %v1088, 1.442695
        %v1143 = vpow.pop %v1142
        %v1144 = vmul.f32 %v1089, 1.442695
        %v1145 = vpow.pop %v1144
        %v1146 = vmul.f32 %v1090, 1.442695
        %v1147 = vpow.pop %v1146
        %v1148 = vmul.f32 %v1091, 1.442695
        %v1149 = vpow.pop %v1148
        %v1150 = vmul.f32 %v1092, 1.442695
        %v1151 = vpow.pop %v1150
        %v1152 = vmul.f32 %v1093, 1.442695
        %v1153 = vpow.pop %v1152
        %v1154 = vmul.f32 %v1094, 1.442695
        %v1155 = vpow.pop %v1154
        %v1156 = vmul.f32 %v1095, 1.442695
        %v1157 = vpow.pop %v1156
        %v1158 = vmul.f32 %v1096, 1.442695
        %v1159 = vpow.pop %v1158
        %v1160 = vmul.f32 %v1097, 1.442695
        %v1161 = vpow.pop %v1160
        %v1162 = vadd.f32 %v1099, %v1101
        %v1163 = vadd.f32 %v1162, %v1103
        %v1164 = vadd.f32 %v1163, %v1105
        %v1165 = vadd.f32 %v1164, %v1107
        %v1166 = vadd.f32 %v1165, %v1109
        %v1167 = vadd.f32 %v1166, %v1111
        %v1168 = vadd.f32 %v1167, %v1113
        %v1169 = vadd.f32 %v1168, %v1115
        %v1170 = vadd.f32 %v1169, %v1117
        %v1171 = vadd.f32 %v1170, %v1119
        %v1172 = vadd.f32 %v1171, %v1121
        %v1173 = vadd.f32 %v1172, %v1123
        %v1174 = vadd.f32 %v1173, %v1125
        %v1175 = vadd.f32 %v1174, %v1127
        %v1176 = vadd.f32 %v1175, %v1129
        %v1177 = vadd.f32 %v1176, %v1131
        %v1178 = vadd.f32 %v1177, %v1133
        %v1179 = vadd.f32 %v1178, %v1135
        %v1180 = vadd.f32 %v1179, %v1137
        %v1181 = vadd.f32 %v1180, %v1139
        %v1182 = vadd.f32 %v1181, %v1141
        %v1183 = vadd.f32 %v1182, %v1143
        %v1184 = vadd.f32 %v1183, %v1145
        %v1185 = vadd.f32 %v1184, %v1147
        %v1186 = vadd.f32 %v1185, %v1149
        %v1187 = vadd.f32 %v1186, %v1151
        %v1188 = vadd.f32 %v1187, %v1153
        %v1189 = vadd.f32 %v1188, %v1155
        %v1190 = vadd.f32 %v1189, %v1157
        %v1191 = vadd.f32 %v1190, %v1159
        %v1192 = vadd.f32 %v1191, %v1161
        %v1193 = vrot.slane %v1192, 4
        %v1194 = vadd.f32 %v1192, %v1193
        %v1195 = vrot.slane %v1194, 2
        %v1196 = vadd.f32 %v1194, %v1195
        %v1197 = vrot.slane %v1196, 1
        %v1198 = vadd.f32 %v1196, %v1197
        %1199 = vmatprep.subr.mxu0 0.0
        %1200 = vmatpush1.msra.mxu0 %v1129
        %1201 = vmatprep.subr.mxu0 0.0
        %1202 = vmatpush1.msra.mxu0 %v1127
        %1203 = vmatprep.subr.mxu0 0.0
        %1204 = vmatpush1.msra.mxu0 %v1125
        %1205 = vmatprep.subr.mxu0 0.0
        %1206 = vmatpush1.msra.mxu0 %v1123
        %1207 = vmatprep.subr.mxu0 0.0
        %1208 = vmatpush1.msra.mxu0 %v1121
        %1209 = vmatprep.subr.mxu0 0.0
        %1210 = vmatpush1.msra.mxu0 %v1119
        %1211 = vmatprep.subr.mxu0 0.0
        %1212 = vmatpush1.msra.mxu0 %v1117
        %1213 = vmatprep.subr.mxu0 0.0
        %1214 = vmatpush1.msra.mxu0 %v1115
        %1215 = vmatprep.subr.mxu0 0.0
        %1216 = vmatpush1.msra.mxu0 %v1113
        %1217 = vmatprep.subr.mxu0 0.0
        %1218 = vmatpush1.msra.mxu0 %v1111
        %1219 = vmatprep.subr.mxu0 0.0
        %1220 = vmatpush1.msra.mxu0 %v1109
        %1221 = vmatprep.subr.mxu0 0.0
        %1222 = vmatpush1.msra.mxu0 %v1107
        %1223 = vmatprep.subr.mxu0 0.0
        %1224 = vmatpush1.msra.mxu0 %v1105
        %1225 = vmatprep.subr.mxu0 0.0
        %1226 = vmatpush1.msra.mxu0 %v1103
        %1227 = vmatprep.subr.mxu0 0.0
        %1228 = vmatpush1.msra.mxu0 %v1101
        %1229 = vmatprep.subr.mxu0 0.0
        %1230 = vmatpush1.msra.mxu0 %v1099
        %1231 = vmatprep.subr.mxu0 0.0
        %1232 = vmatpush2.msra.mxu0 %v1161
        %1233 = vmatprep.subr.mxu0 0.0
        %1234 = vmatpush2.msra.mxu0 %v1159
        %1235 = vmatprep.subr.mxu0 0.0
        %1236 = vmatpush2.msra.mxu0 %v1157
        %1237 = vmatprep.subr.mxu0 0.0
        %1238 = vmatpush2.msra.mxu0 %v1155
        %1239 = vmatprep.subr.mxu0 0.0
        %1240 = vmatpush2.msra.mxu0 %v1153
        %1241 = vmatprep.subr.mxu0 0.0
        %1242 = vmatpush2.msra.mxu0 %v1151
        %1243 = vmatprep.subr.mxu0 0.0
        %1244 = vmatpush2.msra.mxu0 %v1149
        %1245 = vmatprep.subr.mxu0 0.0
        %1246 = vmatpush2.msra.mxu0 %v1147
        %1247 = vmatprep.subr.mxu0 0.0
        %1248 = vmatpush2.msra.mxu0 %v1145
        %1249 = vmatprep.subr.mxu0 0.0
        %1250 = vmatpush2.msra.mxu0 %v1143
        %1251 = vmatprep.subr.mxu0 0.0
        %1252 = vmatpush2.msra.mxu0 %v1141
        %1253 = vmatprep.subr.mxu0 0.0
        %1254 = vmatpush2.msra.mxu0 %v1139
        %1255 = vmatprep.subr.mxu0 0.0
        %1256 = vmatpush2.msra.mxu0 %v1137
        %1257 = vmatprep.subr.mxu0 0.0
        %1258 = vmatpush2.msra.mxu0 %v1135
        %1259 = vmatprep.subr.mxu0 0.0
        %1260 = vmatpush2.msra.mxu0 %v1133
        %1261 = vmatprep.subr.mxu0 0.0
        %1262 = vmatpush2.msra.mxu0 %v1131
        %1263 = vmatprep.mubr.f32.mxu0 %v642
        %1264 = vmatmul.mubr.f32.gmra.mxu0 %v641
        %v1265 = vpop.f32.mrf.mxu0
        %v1266 = vadd.f32 0.0, %v1265
        %v1267 = vpop.f32.mrf.mxu0
        %1268 = vdwg.mxu0
        %v1269 = vrcp.pop %v1198
        %v1270 = vmul.f32 %v1266, %v1269
        %1271 = vst [vmem:[#allocation4] sm:$0xff] %v1270
        %v1272 = vld [vmem:[%s6] sm:$0xff]
        %v1273 = vld [vmem:[#allocation4] sm:$0xff]
        %s1274 = smul.addr %s634, 8
        %s1275 = scalar_lea.vmem [#allocation2], %s1274
        %v1276 = vld [vmem:[%s1275] sm:$0xff]
        %v1277 = vld [vmem:[%s7] sm:$0xff]
        %1279 = vset.pattern.permute.xlu0 0
        %1280 = vperm.xlu0 %1279, %v1277
        %v1281 = vpop.permute.xlu0 %1280
        %v1284 = vsel %vm707, %v1272, 0
        %1286 = vmatprep.subr.mxu0 0.0
        %1287 = vmatpush1.msra.mxu0 0.0
        %1288 = vmatprep.subr.mxu0 0.0
        %1289 = vmatpush1.msra.mxu0 0.0
        %1290 = vmatprep.subr.mxu0 0.0
        %1291 = vmatpush1.msra.mxu0 0.0
        %1292 = vmatprep.subr.mxu0 0.0
        %1293 = vmatpush1.msra.mxu0 0.0
        %1294 = vmatprep.subr.mxu0 0.0
        %1295 = vmatpush1.msra.mxu0 0.0
        %1296 = vmatprep.subr.mxu0 0.0
        %1297 = vmatpush1.msra.mxu0 0.0
        %1298 = vmatprep.subr.mxu0 0.0
        %1299 = vmatpush1.msra.mxu0 0.0
        %1300 = vmatprep.subr.mxu0 0.0
        %1301 = vmatpush1.msra.mxu0 0.0
        %1302 = vmatprep.subr.mxu0 0.0
        %1303 = vmatpush1.msra.mxu0 0.0
        %1304 = vmatprep.subr.mxu0 0.0
        %1305 = vmatpush1.msra.mxu0 0.0
        %1306 = vmatprep.subr.mxu0 0.0
        %1307 = vmatpush1.msra.mxu0 0.0
        %1308 = vmatprep.subr.mxu0 0.0
        %1309 = vmatpush1.msra.mxu0 0.0
        %1310 = vmatprep.subr.mxu0 0.0
        %1311 = vmatpush1.msra.mxu0 0.0
        %1312 = vmatprep.subr.mxu0 0.0
        %1313 = vmatpush1.msra.mxu0 0.0
        %1314 = vmatprep.subr.mxu0 0.0
        %1315 = vmatpush1.msra.mxu0 0.0
        %1316 = vmatprep.subr.mxu0 0.0
        %1317 = vmatpush1.msra.mxu0 %v1273
        %1318 = vmatprep.subr.mxu0 0.0
        %1319 = vmatpush2.msra.mxu0 0.0
        %1320 = vmatprep.subr.mxu0 0.0
        %1321 = vmatpush2.msra.mxu0 0.0
        %1322 = vmatprep.subr.mxu0 0.0
        %1323 = vmatpush2.msra.mxu0 0.0
        %1324 = vmatprep.subr.mxu0 0.0
        %1325 = vmatpush2.msra.mxu0 0.0
        %1326 = vmatprep.subr.mxu0 0.0
        %1327 = vmatpush2.msra.mxu0 0.0
        %1328 = vmatprep.subr.mxu0 0.0
        %1329 = vmatpush2.msra.mxu0 0.0
        %1330 = vmatprep.subr.mxu0 0.0
        %1331 = vmatpush2.msra.mxu0 0.0
        %1332 = vmatprep.subr.mxu0 0.0
        %1333 = vmatpush2.msra.mxu0 0.0
        %1334 = vmatprep.subr.mxu0 0.0
        %1335 = vmatpush2.msra.mxu0 0.0
        %1336 = vmatprep.subr.mxu0 0.0
        %1337 = vmatpush2.msra.mxu0 0.0
        %1338 = vmatprep.subr.mxu0 0.0
        %1339 = vmatpush2.msra.mxu0 0.0
        %1340 = vmatprep.subr.mxu0 0.0
        %1341 = vmatpush2.msra.mxu0 0.0
        %1342 = vmatprep.subr.mxu0 0.0
        %1343 = vmatpush2.msra.mxu0 0.0
        %1344 = vmatprep.subr.mxu0 0.0
        %1345 = vmatpush2.msra.mxu0 0.0
        %1346 = vmatprep.subr.mxu0 0.0
        %1347 = vmatpush2.msra.mxu0 0.0
        %1348 = vmatprep.subr.mxu0 0.0
        %1349 = vmatpush2.msra.mxu0 0.0
        %1350 = vmatprep.mubr.f32.mxu0 0.0
        %1351 = vmatmul.mubr.f32.gmra.mxu0 %v1284
        %v1352 = vpop.f32.mrf.mxu0
        %v1353 = vadd.f32 %v1281, %v1352
        %v1354 = vpop.f32.mrf.mxu0
        %1355 = vdwg.mxu0
        %v1356 = vadd.f32 %v1353, %v1276
        %1357 = vst [vmem:[%s271] sm:$0xff] %v1356
        %s1358 = sand.u32 %s191, 1
        %s1359 = scalar_lea.sflag [#allocation7], %s1358
        %s1360 = sand.u32 %s191, 1
        %s1361 = smul.addr %s1360, 8
        %s1362 = scalar_lea.vmem [#allocation6], %s1361
        // Predicated region
        $region87: #{tpu_custom_call.1} parent=47 // pred_check
          %p1363 = pneg %p201
        $region88: #{tpu_custom_call.1} parent=47 // pred_check_branch
          %1365 = sbr.rel (%p1363) target = $region90
        $region89: #{tpu_custom_call.1} parent=47 // pred_region
          %s1367 = ssub.s32 128, 128
          %1368 = vsyncadd %s1359, %s1367
          %s1369 = smul.addr %s26, 2
          %s1370 = sadd.s32 %s27, %s1369
          %s1371 = smul.addr %s1370, 128
          %s1372 = scalar_lea.hbm %s8, %s1371
          %s1374 = sshll.u32 %s1362, 4
          %s1375 = int_to_ptr.vmem [resolvable:$true] %s1374
          %1377 = dma.vmem_to_hbm [thread:$0]  %s1375, 128, %s1372, %s1359
        $region90: #{tpu_custom_call.1} parent=47 // pred_fallthru
          _
      $region48: #{tpu_custom_call.1} parent=5 // pred_fallthru
        _
      %p1378 = scmp.le.s32.totalorder 2, %s17
      // Predicated region
      $region91: #{tpu_custom_call.1} parent=5 // pred_check
        %p1379 = pneg %p1378
      $region92: #{tpu_custom_call.1} parent=5 // pred_check_branch
        %1381 = sbr.rel (%p1379) target = $region94
      $region93: #{tpu_custom_call.1} parent=5 // pred_region
        %s1382 = ssub.s32 %s17, 2
        // Predicated region
        $region95: #{tpu_custom_call.1} parent=93 // pred_check
          %p1383 = pneg %p207
        $region96: #{tpu_custom_call.1} parent=93 // pred_check_branch
          %1385 = sbr.rel (%p1383) target = $region98
        $region97: #{tpu_custom_call.1} parent=93 // pred_region
          %s1386 = sand.u32 %s192, 1
          %s1387 = scalar_lea.sflag [#allocation7], %s1386
          %s1388 = sand.u32 %s192, 1
          %s1389 = smul.addr %s1388, 8
          %s1390 = scalar_lea.vmem [#allocation6], %s1389
          %1391 = dma.done %s1387, 128
        $region98: #{tpu_custom_call.1} parent=93 // pred_fallthru
          _
      $region94: #{tpu_custom_call.1} parent=5 // pred_fallthru
        _
    $region6: #{tpu_custom_call.1} parent=1 // loop_footer
      %s21 = sadd.s32 1, %s17
    $region7: #{tpu_custom_call.1} parent=1 // loop_footer_branch
      %16 = sbr.rel target = $region3
    $region8: #{tpu_custom_call.1} parent=1 // loop_exit
      _
    %1392 = vsyncpa [#allocation7], 1
    %s1393 = scalar_lea.sflag [#allocation7], 1
    %1394 = vsyncpa %s1393, 1
  %1395 = vsyncmov [#allocation5]
  %s1396 = vpop.sfrf %1395
  %p1397 = scmp.eq.s32.totalorder %s1396, 0
  %p1398 = pneg %p1397
  %1400 = shalt.err (%p1398)

</llo_original>
